<compile_context>
chip_gen: v5e
topology: v5e:2x2
jax: 0.10.0
libtpu: 0.0.40
codegen_flags: <defaults>
</compile_context>

<pallas_src>
from functools import partial

import jax
import jax.numpy as jnp
from jax.experimental import pallas as pl
from jax.experimental.pallas import tpu as pltpu


# ----------------------------------------------------------------------------
# Fused CBAM kernel: one batch element per grid step, x block = (1, C, H*W)
# ----------------------------------------------------------------------------
def _cbam_kernel(x_ref, w1_ref, w2_ref, mask_ref, wsp_ref, o_ref, pad_ref,
                 *, C, H, W, K):
    HW = H * W
    P = K // 2
    S = P * W + P                    # flat offset of pixel (0, 0) in the extended buffer

    x = x_ref[0]                     # (C, HW) float32, lane-dense on HW

    # ---------------- channel attention ----------------
    avg = jnp.sum(x, axis=1, keepdims=True) * (1.0 / HW)     # (C, 1)  AdaptiveAvgPool2d(1)
    mx = jnp.max(x, axis=1, keepdims=True)                   # (C, 1)  AdaptiveMaxPool2d(1)
    pooled = jnp.concatenate([avg, mx], axis=1)              # (C, 2)

    # f1 (1x1 conv, no bias) -> ReLU -> f2 (1x1 conv, no bias), shared weights
    h = jnp.dot(w1_ref[...], pooled, preferred_element_type=jnp.float32)   # (Cr, 2)
    h = jnp.maximum(h, 0.0)
    y = jnp.dot(w2_ref[...], h, preferred_element_type=jnp.float32)        # (C, 2)
    ch_scale = jax.nn.sigmoid(y[:, 0:1] + y[:, 1:2])         # (C, 1)

    xc = x * ch_scale                                        # (C, HW) lane-dense multiply

    # ---------------- spatial attention ----------------
    sp_avg = jnp.sum(xc, axis=0, keepdims=True) * (1.0 / C)  # (1, HW) mean over channels
    sp_max = jnp.max(xc, axis=0, keepdims=True)              # (1, HW) max over channels

    # Zero-extended flat buffer: ext[c, S + n] = map[c, n], zeros outside.
    # Only the borders need (re)zeroing each step -- interior fully overwritten.
    border = jnp.zeros((2, S), jnp.float32)
    pad_ref[:, 0:S] = border
    pad_ref[:, S + HW:S + HW + S] = border
    pad_ref[0:1, S:S + HW] = sp_avg
    pad_ref[1:2, S:S + HW] = sp_max
    ext = pad_ref[...]                                       # (2, HW + 2S)

    # KxK conv (2 input channels -> 1 output, no bias) via flat static shifts.
    # Row (vertical) out-of-image taps land in the zero borders; column
    # (horizontal) wrap-around taps are killed by the precomputed masks.
    masks = mask_ref[...]                                    # (K, HW) of 0.0 / 1.0
    acc = jnp.zeros((1, HW), jnp.float32)
    for kj in range(K):
        dj = kj - P
        col_acc = jnp.zeros((1, HW), jnp.float32)
        for ki in range(K):
            di = ki - P
            off = S + di * W + dj
            win = ext[:, off:off + HW]                       # (2, HW)
            w_avg = wsp_ref[ki * K + kj]                     # scalar from SMEM
            w_max = wsp_ref[K * K + ki * K + kj]             # scalar from SMEM
            col_acc = col_acc + w_avg * win[0:1, :] + w_max * win[1:2, :]
        acc = acc + masks[kj:kj + 1, :] * col_acc

    att = jax.nn.sigmoid(acc)                                # (1, HW)
    o_ref[0] = (xc * att).astype(o_ref.dtype)                # lane-dense store


# ----------------------------------------------------------------------------
# Wrapper
# ----------------------------------------------------------------------------
def cbam_forward(x, w1, w2, w_sp, *, kernel_size=7):
    B, C, H, W = x.shape
    Cr = w1.shape[0]
    HW = H * W
    K = kernel_size
    P = K // 2
    S = P * W + P

    x2 = x.reshape(B, C, HW)                                 # free relayout at XLA level
    w_flat = w_sp.reshape(2 * K * K).astype(jnp.float32)

    # Column-validity masks for the flattened-shift conv:
    # col_mask[kj, i*W + j] == 1  iff  0 <= j + (kj - P) < W.
    col = jnp.arange(W, dtype=jnp.int32)
    mask_rows = []
    for kj in range(K):
        dj = kj - P
        valid = ((col + dj) >= 0) & ((col + dj) < W)
        mask_rows.append(jnp.tile(valid, H))
    col_mask = jnp.stack(mask_rows, axis=0).astype(jnp.float32)   # (K, HW)

    out = pl.pallas_call(
        partial(_cbam_kernel, C=C, H=H, W=W, K=K),
        out_shape=jax.ShapeDtypeStruct((B, C, HW), x.dtype),
        grid=(B,),
        in_specs=[
            pl.BlockSpec((1, C, HW), lambda b: (b, 0, 0)),
            pl.BlockSpec((Cr, C), lambda b: (0, 0)),
            pl.BlockSpec((C, Cr), lambda b: (0, 0)),
            pl.BlockSpec((K, HW), lambda b: (0, 0)),
            pl.BlockSpec(memory_space=pltpu.MemorySpace.SMEM),
        ],
        out_specs=pl.BlockSpec((1, C, HW), lambda b: (b, 0, 0)),
        scratch_shapes=[pltpu.VMEM((2, HW + 2 * S), jnp.float32)],
        compiler_params=pltpu.CompilerParams(
            dimension_semantics=("parallel",),
            vmem_limit_bytes=64 * 1024 * 1024,
        ),
    )(x2, w1, w2, col_mask, w_flat)
    return out.reshape(B, C, H, W)


# ----------------------------------------------------------------------------
# Pure-JAX reference (mirrors the PyTorch module exactly)
# ----------------------------------------------------------------------------
def cbam_ref(x, w1, w2, w_sp, *, kernel_size=7):
    avg = x.mean(axis=(2, 3))                                # (B, C)
    mx = x.max(axis=(2, 3))                                  # (B, C)

    def mlp(v):
        h = jnp.maximum(v @ w1.T, 0.0)
        return h @ w2.T

    scale = jax.nn.sigmoid(mlp(avg) + mlp(mx))               # (B, C)
    out = x * scale[:, :, None, None]

    ca_avg = out.mean(axis=1, keepdims=True)
    ca_max = out.max(axis=1, keepdims=True)
    feat = jnp.concatenate([ca_avg, ca_max], axis=1)         # (B, 2, H, W)
    pad = kernel_size // 2
    att = jax.lax.conv_general_dilated(
        feat, w_sp[None], window_strides=(1, 1),
        padding=((pad, pad), (pad, pad)),
        dimension_numbers=("NCHW", "OIHW", "NCHW"))
    att = jax.nn.sigmoid(att)
    return out * att


if __name__ == "__main__":
    B, C, H, W = 2, 32, 16, 16
    ratio, ksize = 16, 7
    Cr = C // ratio

    key = jax.random.PRNGKey(0)
    kx, k1, k2, k3 = jax.random.split(key, 4)
    x = jax.random.normal(kx, (B, C, H, W), dtype=jnp.float32)
    # Deterministic synthetic parameters (Conv2d weights, no bias):
    w1 = 0.1 * jax.random.normal(k1, (Cr, C), dtype=jnp.float32)       # f1: C -> C/r (1x1)
    w2 = 0.1 * jax.random.normal(k2, (C, Cr), dtype=jnp.float32)       # f2: C/r -> C (1x1)
    w_sp = 0.1 * jax.random.normal(k3, (2, ksize, ksize), dtype=jnp.float32)  # spatial conv 2->1

    out = cbam_forward(x, w1, w2, w_sp, kernel_size=ksize)
    out = jax.block_until_ready(out)

    ref = cbam_ref(x, w1, w2, w_sp, kernel_size=ksize)
    assert out.shape == (B, C, H, W)
    assert jnp.allclose(out, ref, atol=1e-4, rtol=1e-4), float(jnp.max(jnp.abs(out - ref)))

    print("KERNEL_OK")
</pallas_src>

<mosaic_0001>
module attributes {stable_mosaic.version = 11 : i64} {
  func.func @_cbam_kernel(%arg0: i32, %arg1: memref<1x32x256xf32, #tpu.memory_space<vmem>>, %arg2: memref<2x32xf32, #tpu.memory_space<vmem>>, %arg3: memref<32x2xf32, #tpu.memory_space<vmem>>, %arg4: memref<7x256xf32, #tpu.memory_space<vmem>>, %arg5: memref<98xf32, #tpu.memory_space<smem>>, %arg6: memref<1x32x256xf32, #tpu.memory_space<vmem>>, %arg7: memref<2x358xf32, #tpu.memory_space<vmem>>) attributes {dimension_semantics = [#tpu.dimension_semantics<parallel>], iteration_bounds = array<i64: 2>, scalar_prefetch = 0 : i64, scratch_operands = 1 : i64, tpu.core_type = #tpu.core_type<tc>, window_params = [{transform_indices = @transform_0, window_bounds = array<i64: 1, 32, 256>}, {pipeline_mode = #tpu.pipeline_mode<synchronous>, transform_indices = @transform_1, window_bounds = array<i64: 2, 32>}, {pipeline_mode = #tpu.pipeline_mode<synchronous>, transform_indices = @transform_2, window_bounds = array<i64: 32, 2>}, {pipeline_mode = #tpu.pipeline_mode<synchronous>, transform_indices = @transform_3, window_bounds = array<i64: 7, 256>}, {transform_indices = @transform_4, window_bounds = array<i64: 98>}, {transform_indices = @transform_5, window_bounds = array<i64: 1, 32, 256>}]} {
    %c0 = arith.constant 0 : index
    %c0_0 = arith.constant 0 : index
    %c0_1 = arith.constant 0 : index
    %0 = vector.load %arg1[%c0, %c0_0, %c0_1] : memref<1x32x256xf32, #tpu.memory_space<vmem>>, vector<1x32x256xf32>
    %1 = vector.shape_cast %0 : vector<1x32x256xf32> to vector<32x256xf32>
    %cst = arith.constant dense<0.000000e+00> : vector<32xf32>
    %2 = vector.multi_reduction <add>, %1, %cst [1] : vector<32x256xf32> to vector<32xf32>
    %3 = vector.shape_cast %2 : vector<32xf32> to vector<32x1xf32>
    %cst_2 = arith.constant 3.906250e-03 : f32
    %4 = vector.broadcast %cst_2 : f32 to vector<32x1xf32>
    %5 = arith.mulf %3, %4 : vector<32x1xf32>
    %cst_3 = arith.constant dense<0xFF800000> : vector<32xf32>
    %6 = vector.multi_reduction <maximumf>, %1, %cst_3 [1] : vector<32x256xf32> to vector<32xf32>
    %7 = vector.shape_cast %6 : vector<32xf32> to vector<32x1xf32>
    %8 = tpu.concatenate %5, %7 in 1 : vector<32x1xf32>, vector<32x1xf32> -> vector<32x2xf32>
    %c0_4 = arith.constant 0 : index
    %c0_5 = arith.constant 0 : index
    %9 = vector.load %arg2[%c0_4, %c0_5] : memref<2x32xf32, #tpu.memory_space<vmem>>, vector<2x32xf32>
    %cst_6 = arith.constant dense<0.000000e+00> : vector<2x2xf32>
    %10 = tpu.matmul %9, %8, %cst_6 {dimension_numbers = #tpu.dot_dimension_numbers<[1], [0], [0], [1], [0, 0, 1, 1], [], []>} : vector<2x32xf32>, vector<32x2xf32>, vector<2x2xf32> -> vector<2x2xf32>
    %cst_7 = arith.constant 0.000000e+00 : f32
    %11 = vector.broadcast %cst_7 : f32 to vector<2x2xf32>
    %12 = arith.maximumf %10, %11 : vector<2x2xf32>
    %c0_8 = arith.constant 0 : index
    %c0_9 = arith.constant 0 : index
    %13 = vector.load %arg3[%c0_8, %c0_9] : memref<32x2xf32, #tpu.memory_space<vmem>>, vector<32x2xf32>
    %cst_10 = arith.constant dense<0.000000e+00> : vector<32x2xf32>
    %14 = tpu.matmul %13, %12, %cst_10 {dimension_numbers = #tpu.dot_dimension_numbers<[1], [0], [0], [1], [0, 0, 1, 1], [], []>} : vector<32x2xf32>, vector<2x2xf32>, vector<32x2xf32> -> vector<32x2xf32>
    %15 = vector.extract_strided_slice %14 {offsets = [0, 0], sizes = [32, 1], strides = [1, 1]} : vector<32x2xf32> to vector<32x1xf32>
    %16 = vector.extract_strided_slice %14 {offsets = [0, 1], sizes = [32, 1], strides = [1, 1]} : vector<32x2xf32> to vector<32x1xf32>
    %17 = arith.addf %15, %16 : vector<32x1xf32>
    %18 = arith.negf %17 : vector<32x1xf32>
    %19 = math.exp %18 : vector<32x1xf32>
    %cst_11 = arith.constant 1.000000e+00 : f32
    %20 = vector.broadcast %cst_11 : f32 to vector<32x1xf32>
    %21 = arith.addf %20, %19 : vector<32x1xf32>
    %22 = arith.divf %20, %21 : vector<32x1xf32>
    %23 = vector.broadcast %22 : vector<32x1xf32> to vector<32x256xf32>
    %24 = arith.mulf %1, %23 : vector<32x256xf32>
    %cst_12 = arith.constant dense<0.000000e+00> : vector<256xf32>
    %25 = vector.multi_reduction <add>, %24, %cst_12 [0] : vector<32x256xf32> to vector<256xf32>
    %26 = vector.shape_cast %25 : vector<256xf32> to vector<1x256xf32>
    %cst_13 = arith.constant 3.125000e-02 : f32
    %27 = vector.broadcast %cst_13 : f32 to vector<1x256xf32>
    %28 = arith.mulf %26, %27 : vector<1x256xf32>
    %cst_14 = arith.constant dense<0xFF800000> : vector<256xf32>
    %29 = vector.multi_reduction <maximumf>, %24, %cst_14 [0] : vector<32x256xf32> to vector<256xf32>
    %30 = vector.shape_cast %29 : vector<256xf32> to vector<1x256xf32>
    %cst_15 = arith.constant 0.000000e+00 : f32
    %31 = vector.broadcast %cst_15 : f32 to vector<2x51xf32>
    %c0_16 = arith.constant 0 : index
    %c0_17 = arith.constant 0 : index
    %32 = vector.load %arg7[%c0_16, %c0_17] : memref<2x358xf32, #tpu.memory_space<vmem>>, vector<2x51xf32>
    tpu.vector_store %arg7[%c0_16, %c0_17], %31 {strides = array<i32>} : memref<2x358xf32, #tpu.memory_space<vmem>>, vector<2x51xf32>,
    %c0_18 = arith.constant 0 : index
    %c307 = arith.constant 307 : index
    %33 = vector.load %arg7[%c0_18, %c307] : memref<2x358xf32, #tpu.memory_space<vmem>>, vector<2x51xf32>
    tpu.vector_store %arg7[%c0_18, %c307], %31 {strides = array<i32>} : memref<2x358xf32, #tpu.memory_space<vmem>>, vector<2x51xf32>,
    %c0_19 = arith.constant 0 : index
    %c51 = arith.constant 51 : index
    %34 = vector.load %arg7[%c0_19, %c51] : memref<2x358xf32, #tpu.memory_space<vmem>>, vector<1x256xf32>
    tpu.vector_store %arg7[%c0_19, %c51], %28 {strides = array<i32>} : memref<2x358xf32, #tpu.memory_space<vmem>>, vector<1x256xf32>,
    %c1 = arith.constant 1 : index
    %c51_20 = arith.constant 51 : index
    %35 = vector.load %arg7[%c1, %c51_20] : memref<2x358xf32, #tpu.memory_space<vmem>>, vector<1x256xf32>
    tpu.vector_store %arg7[%c1, %c51_20], %30 {strides = array<i32>} : memref<2x358xf32, #tpu.memory_space<vmem>>, vector<1x256xf32>,
    %c0_21 = arith.constant 0 : index
    %c0_22 = arith.constant 0 : index
    %36 = vector.load %arg7[%c0_21, %c0_22] : memref<2x358xf32, #tpu.memory_space<vmem>>, vector<2x358xf32>
    %c0_23 = arith.constant 0 : index
    %c0_24 = arith.constant 0 : index
    %37 = vector.load %arg4[%c0_23, %c0_24] : memref<7x256xf32, #tpu.memory_space<vmem>>, vector<7x256xf32>
    %cst_25 = arith.constant 0.000000e+00 : f32
    %38 = vector.broadcast %cst_25 : f32 to vector<1x256xf32>
    %cst_26 = arith.constant 0.000000e+00 : f32
    %39 = vector.broadcast %cst_26 : f32 to vector<1x256xf32>
    %40 = vector.extract_strided_slice %36 {offsets = [0, 0], sizes = [2, 256], strides = [1, 1]} : vector<2x358xf32> to vector<2x256xf32>
    %c0_27 = arith.constant 0 : index
    %41 = memref.load %arg5[%c0_27] : memref<98xf32, #tpu.memory_space<smem>>
    %c49 = arith.constant 49 : index
    %42 = memref.load %arg5[%c49] : memref<98xf32, #tpu.memory_space<smem>>
    %43 = vector.extract_strided_slice %40 {offsets = [0, 0], sizes = [1, 256], strides = [1, 1]} : vector<2x256xf32> to vector<1x256xf32>
    %44 = vector.broadcast %41 : f32 to vector<1x256xf32>
    %45 = arith.mulf %44, %43 : vector<1x256xf32>
    %46 = arith.addf %39, %45 : vector<1x256xf32>
    %47 = vector.extract_strided_slice %40 {offsets = [1, 0], sizes = [1, 256], strides = [1, 1]} : vector<2x256xf32> to vector<1x256xf32>
    %48 = vector.broadcast %42 : f32 to vector<1x256xf32>
    %49 = arith.mulf %48, %47 : vector<1x256xf32>
    %50 = arith.addf %46, %49 : vector<1x256xf32>
    %51 = vector.extract_strided_slice %36 {offsets = [0, 16], sizes = [2, 256], strides = [1, 1]} : vector<2x358xf32> to vector<2x256xf32>
    %c7 = arith.constant 7 : index
    %52 = memref.load %arg5[%c7] : memref<98xf32, #tpu.memory_space<smem>>
    %c56 = arith.constant 56 : index
    %53 = memref.load %arg5[%c56] : memref<98xf32, #tpu.memory_space<smem>>
    %54 = vector.extract_strided_slice %51 {offsets = [0, 0], sizes = [1, 256], strides = [1, 1]} : vector<2x256xf32> to vector<1x256xf32>
    %55 = vector.broadcast %52 : f32 to vector<1x256xf32>
    %56 = arith.mulf %55, %54 : vector<1x256xf32>
    %57 = arith.addf %50, %56 : vector<1x256xf32>
    %58 = vector.extract_strided_slice %51 {offsets = [1, 0], sizes = [1, 256], strides = [1, 1]} : vector<2x256xf32> to vector<1x256xf32>
    %59 = vector.broadcast %53 : f32 to vector<1x256xf32>
    %60 = arith.mulf %59, %58 : vector<1x256xf32>
    %61 = arith.addf %57, %60 : vector<1x256xf32>
    %62 = vector.extract_strided_slice %36 {offsets = [0, 32], sizes = [2, 256], strides = [1, 1]} : vector<2x358xf32> to vector<2x256xf32>
    %c14 = arith.constant 14 : index
    %63 = memref.load %arg5[%c14] : memref<98xf32, #tpu.memory_space<smem>>
    %c63 = arith.constant 63 : index
    %64 = memref.load %arg5[%c63] : memref<98xf32, #tpu.memory_space<smem>>
    %65 = vector.extract_strided_slice %62 {offsets = [0, 0], sizes = [1, 256], strides = [1, 1]} : vector<2x256xf32> to vector<1x256xf32>
    %66 = vector.broadcast %63 : f32 to vector<1x256xf32>
    %67 = arith.mulf %66, %65 : vector<1x256xf32>
    %68 = arith.addf %61, %67 : vector<1x256xf32>
    %69 = vector.extract_strided_slice %62 {offsets = [1, 0], sizes = [1, 256], strides = [1, 1]} : vector<2x256xf32> to vector<1x256xf32>
    %70 = vector.broadcast %64 : f32 to vector<1x256xf32>
    %71 = arith.mulf %70, %69 : vector<1x256xf32>
    %72 = arith.addf %68, %71 : vector<1x256xf32>
    %73 = vector.extract_strided_slice %36 {offsets = [0, 48], sizes = [2, 256], strides = [1, 1]} : vector<2x358xf32> to vector<2x256xf32>
    %c21 = arith.constant 21 : index
    %74 = memref.load %arg5[%c21] : memref<98xf32, #tpu.memory_space<smem>>
    %c70 = arith.constant 70 : index
    %75 = memref.load %arg5[%c70] : memref<98xf32, #tpu.memory_space<smem>>
    %76 = vector.extract_strided_slice %73 {offsets = [0, 0], sizes = [1, 256], strides = [1, 1]} : vector<2x256xf32> to vector<1x256xf32>
    %77 = vector.broadcast %74 : f32 to vector<1x256xf32>
    %78 = arith.mulf %77, %76 : vector<1x256xf32>
    %79 = arith.addf %72, %78 : vector<1x256xf32>
    %80 = vector.extract_strided_slice %73 {offsets = [1, 0], sizes = [1, 256], strides = [1, 1]} : vector<2x256xf32> to vector<1x256xf32>
    %81 = vector.broadcast %75 : f32 to vector<1x256xf32>
    %82 = arith.mulf %81, %80 : vector<1x256xf32>
    %83 = arith.addf %79, %82 : vector<1x256xf32>
    %84 = vector.extract_strided_slice %36 {offsets = [0, 64], sizes = [2, 256], strides = [1, 1]} : vector<2x358xf32> to vector<2x256xf32>
    %c28 = arith.constant 28 : index
    %85 = memref.load %arg5[%c28] : memref<98xf32, #tpu.memory_space<smem>>
    %c77 = arith.constant 77 : index
    %86 = memref.load %arg5[%c77] : memref<98xf32, #tpu.memory_space<smem>>
    %87 = vector.extract_strided_slice %84 {offsets = [0, 0], sizes = [1, 256], strides = [1, 1]} : vector<2x256xf32> to vector<1x256xf32>
    %88 = vector.broadcast %85 : f32 to vector<1x256xf32>
    %89 = arith.mulf %88, %87 : vector<1x256xf32>
    %90 = arith.addf %83, %89 : vector<1x256xf32>
    %91 = vector.extract_strided_slice %84 {offsets = [1, 0], sizes = [1, 256], strides = [1, 1]} : vector<2x256xf32> to vector<1x256xf32>
    %92 = vector.broadcast %86 : f32 to vector<1x256xf32>
    %93 = arith.mulf %92, %91 : vector<1x256xf32>
    %94 = arith.addf %90, %93 : vector<1x256xf32>
    %95 = vector.extract_strided_slice %36 {offsets = [0, 80], sizes = [2, 256], strides = [1, 1]} : vector<2x358xf32> to vector<2x256xf32>
    %c35 = arith.constant 35 : index
    %96 = memref.load %arg5[%c35] : memref<98xf32, #tpu.memory_space<smem>>
    %c84 = arith.constant 84 : index
    %97 = memref.load %arg5[%c84] : memref<98xf32, #tpu.memory_space<smem>>
    %98 = vector.extract_strided_slice %95 {offsets = [0, 0], sizes = [1, 256], strides = [1, 1]} : vector<2x256xf32> to vector<1x256xf32>
    %99 = vector.broadcast %96 : f32 to vector<1x256xf32>
    %100 = arith.mulf %99, %98 : vector<1x256xf32>
    %101 = arith.addf %94, %100 : vector<1x256xf32>
    %102 = vector.extract_strided_slice %95 {offsets = [1, 0], sizes = [1, 256], strides = [1, 1]} : vector<2x256xf32> to vector<1x256xf32>
    %103 = vector.broadcast %97 : f32 to vector<1x256xf32>
    %104 = arith.mulf %103, %102 : vector<1x256xf32>
    %105 = arith.addf %101, %104 : vector<1x256xf32>
    %106 = vector.extract_strided_slice %36 {offsets = [0, 96], sizes = [2, 256], strides = [1, 1]} : vector<2x358xf32> to vector<2x256xf32>
    %c42 = arith.constant 42 : index
    %107 = memref.load %arg5[%c42] : memref<98xf32, #tpu.memory_space<smem>>
    %c91 = arith.constant 91 : index
    %108 = memref.load %arg5[%c91] : memref<98xf32, #tpu.memory_space<smem>>
    %109 = vector.extract_strided_slice %106 {offsets = [0, 0], sizes = [1, 256], strides = [1, 1]} : vector<2x256xf32> to vector<1x256xf32>
    %110 = vector.broadcast %107 : f32 to vector<1x256xf32>
    %111 = arith.mulf %110, %109 : vector<1x256xf32>
    %112 = arith.addf %105, %111 : vector<1x256xf32>
    %113 = vector.extract_strided_slice %106 {offsets = [1, 0], sizes = [1, 256], strides = [1, 1]} : vector<2x256xf32> to vector<1x256xf32>
    %114 = vector.broadcast %108 : f32 to vector<1x256xf32>
    %115 = arith.mulf %114, %113 : vector<1x256xf32>
    %116 = arith.addf %112, %115 : vector<1x256xf32>
    %117 = vector.extract_strided_slice %37 {offsets = [0, 0], sizes = [1, 256], strides = [1, 1]} : vector<7x256xf32> to vector<1x256xf32>
    %118 = arith.mulf %117, %116 : vector<1x256xf32>
    %119 = arith.addf %38, %118 : vector<1x256xf32>
    %cst_28 = arith.constant 0.000000e+00 : f32
    %120 = vector.broadcast %cst_28 : f32 to vector<1x256xf32>
    %121 = vector.extract_strided_slice %36 {offsets = [0, 1], sizes = [2, 256], strides = [1, 1]} : vector<2x358xf32> to vector<2x256xf32>
    %c1_29 = arith.constant 1 : index
    %122 = memref.load %arg5[%c1_29] : memref<98xf32, #tpu.memory_space<smem>>
    %c50 = arith.constant 50 : index
    %123 = memref.load %arg5[%c50] : memref<98xf32, #tpu.memory_space<smem>>
    %124 = vector.extract_strided_slice %121 {offsets = [0, 0], sizes = [1, 256], strides = [1, 1]} : vector<2x256xf32> to vector<1x256xf32>
    %125 = vector.broadcast %122 : f32 to vector<1x256xf32>
    %126 = arith.mulf %125, %124 : vector<1x256xf32>
    %127 = arith.addf %120, %126 : vector<1x256xf32>
    %128 = vector.extract_strided_slice %121 {offsets = [1, 0], sizes = [1, 256], strides = [1, 1]} : vector<2x256xf32> to vector<1x256xf32>
    %129 = vector.broadcast %123 : f32 to vector<1x256xf32>
    %130 = arith.mulf %129, %128 : vector<1x256xf32>
    %131 = arith.addf %127, %130 : vector<1x256xf32>
    %132 = vector.extract_strided_slice %36 {offsets = [0, 17], sizes = [2, 256], strides = [1, 1]} : vector<2x358xf32> to vector<2x256xf32>
    %c8 = arith.constant 8 : index
    %133 = memref.load %arg5[%c8] : memref<98xf32, #tpu.memory_space<smem>>
    %c57 = arith.constant 57 : index
    %134 = memref.load %arg5[%c57] : memref<98xf32, #tpu.memory_space<smem>>
    %135 = vector.extract_strided_slice %132 {offsets = [0, 0], sizes = [1, 256], strides = [1, 1]} : vector<2x256xf32> to vector<1x256xf32>
    %136 = vector.broadcast %133 : f32 to vector<1x256xf32>
    %137 = arith.mulf %136, %135 : vector<1x256xf32>
    %138 = arith.addf %131, %137 : vector<1x256xf32>
    %139 = vector.extract_strided_slice %132 {offsets = [1, 0], sizes = [1, 256], strides = [1, 1]} : vector<2x256xf32> to vector<1x256xf32>
    %140 = vector.broadcast %134 : f32 to vector<1x256xf32>
    %141 = arith.mulf %140, %139 : vector<1x256xf32>
    %142 = arith.addf %138, %141 : vector<1x256xf32>
    %143 = vector.extract_strided_slice %36 {offsets = [0, 33], sizes = [2, 256], strides = [1, 1]} : vector<2x358xf32> to vector<2x256xf32>
    %c15 = arith.constant 15 : index
    %144 = memref.load %arg5[%c15] : memref<98xf32, #tpu.memory_space<smem>>
    %c64 = arith.constant 64 : index
    %145 = memref.load %arg5[%c64] : memref<98xf32, #tpu.memory_space<smem>>
    %146 = vector.extract_strided_slice %143 {offsets = [0, 0], sizes = [1, 256], strides = [1, 1]} : vector<2x256xf32> to vector<1x256xf32>
    %147 = vector.broadcast %144 : f32 to vector<1x256xf32>
    %148 = arith.mulf %147, %146 : vector<1x256xf32>
    %149 = arith.addf %142, %148 : vector<1x256xf32>
    %150 = vector.extract_strided_slice %143 {offsets = [1, 0], sizes = [1, 256], strides = [1, 1]} : vector<2x256xf32> to vector<1x256xf32>
    %151 = vector.broadcast %145 : f32 to vector<1x256xf32>
    %152 = arith.mulf %151, %150 : vector<1x256xf32>
    %153 = arith.addf %149, %152 : vector<1x256xf32>
    %154 = vector.extract_strided_slice %36 {offsets = [0, 49], sizes = [2, 256], strides = [1, 1]} : vector<2x358xf32> to vector<2x256xf32>
    %c22 = arith.constant 22 : index
    %155 = memref.load %arg5[%c22] : memref<98xf32, #tpu.memory_space<smem>>
    %c71 = arith.constant 71 : index
    %156 = memref.load %arg5[%c71] : memref<98xf32, #tpu.memory_space<smem>>
    %157 = vector.extract_strided_slice %154 {offsets = [0, 0], sizes = [1, 256], strides = [1, 1]} : vector<2x256xf32> to vector<1x256xf32>
    %158 = vector.broadcast %155 : f32 to vector<1x256xf32>
    %159 = arith.mulf %158, %157 : vector<1x256xf32>
    %160 = arith.addf %153, %159 : vector<1x256xf32>
    %161 = vector.extract_strided_slice %154 {offsets = [1, 0], sizes = [1, 256], strides = [1, 1]} : vector<2x256xf32> to vector<1x256xf32>
    %162 = vector.broadcast %156 : f32 to vector<1x256xf32>
    %163 = arith.mulf %162, %161 : vector<1x256xf32>
    %164 = arith.addf %160, %163 : vector<1x256xf32>
    %165 = vector.extract_strided_slice %36 {offsets = [0, 65], sizes = [2, 256], strides = [1, 1]} : vector<2x358xf32> to vector<2x256xf32>
    %c29 = arith.constant 29 : index
    %166 = memref.load %arg5[%c29] : memref<98xf32, #tpu.memory_space<smem>>
    %c78 = arith.constant 78 : index
    %167 = memref.load %arg5[%c78] : memref<98xf32, #tpu.memory_space<smem>>
    %168 = vector.extract_strided_slice %165 {offsets = [0, 0], sizes = [1, 256], strides = [1, 1]} : vector<2x256xf32> to vector<1x256xf32>
    %169 = vector.broadcast %166 : f32 to vector<1x256xf32>
    %170 = arith.mulf %169, %168 : vector<1x256xf32>
    %171 = arith.addf %164, %170 : vector<1x256xf32>
    %172 = vector.extract_strided_slice %165 {offsets = [1, 0], sizes = [1, 256], strides = [1, 1]} : vector<2x256xf32> to vector<1x256xf32>
    %173 = vector.broadcast %167 : f32 to vector<1x256xf32>
    %174 = arith.mulf %173, %172 : vector<1x256xf32>
    %175 = arith.addf %171, %174 : vector<1x256xf32>
    %176 = vector.extract_strided_slice %36 {offsets = [0, 81], sizes = [2, 256], strides = [1, 1]} : vector<2x358xf32> to vector<2x256xf32>
    %c36 = arith.constant 36 : index
    %177 = memref.load %arg5[%c36] : memref<98xf32, #tpu.memory_space<smem>>
    %c85 = arith.constant 85 : index
    %178 = memref.load %arg5[%c85] : memref<98xf32, #tpu.memory_space<smem>>
    %179 = vector.extract_strided_slice %176 {offsets = [0, 0], sizes = [1, 256], strides = [1, 1]} : vector<2x256xf32> to vector<1x256xf32>
    %180 = vector.broadcast %177 : f32 to vector<1x256xf32>
    %181 = arith.mulf %180, %179 : vector<1x256xf32>
    %182 = arith.addf %175, %181 : vector<1x256xf32>
    %183 = vector.extract_strided_slice %176 {offsets = [1, 0], sizes = [1, 256], strides = [1, 1]} : vector<2x256xf32> to vector<1x256xf32>
    %184 = vector.broadcast %178 : f32 to vector<1x256xf32>
    %185 = arith.mulf %184, %183 : vector<1x256xf32>
    %186 = arith.addf %182, %185 : vector<1x256xf32>
    %187 = vector.extract_strided_slice %36 {offsets = [0, 97], sizes = [2, 256], strides = [1, 1]} : vector<2x358xf32> to vector<2x256xf32>
    %c43 = arith.constant 43 : index
    %188 = memref.load %arg5[%c43] : memref<98xf32, #tpu.memory_space<smem>>
    %c92 = arith.constant 92 : index
    %189 = memref.load %arg5[%c92] : memref<98xf32, #tpu.memory_space<smem>>
    %190 = vector.extract_strided_slice %187 {offsets = [0, 0], sizes = [1, 256], strides = [1, 1]} : vector<2x256xf32> to vector<1x256xf32>
    %191 = vector.broadcast %188 : f32 to vector<1x256xf32>
    %192 = arith.mulf %191, %190 : vector<1x256xf32>
    %193 = arith.addf %186, %192 : vector<1x256xf32>
    %194 = vector.extract_strided_slice %187 {offsets = [1, 0], sizes = [1, 256], strides = [1, 1]} : vector<2x256xf32> to vector<1x256xf32>
    %195 = vector.broadcast %189 : f32 to vector<1x256xf32>
    %196 = arith.mulf %195, %194 : vector<1x256xf32>
    %197 = arith.addf %193, %196 : vector<1x256xf32>
    %198 = vector.extract_strided_slice %37 {offsets = [1, 0], sizes = [1, 256], strides = [1, 1]} : vector<7x256xf32> to vector<1x256xf32>
    %199 = arith.mulf %198, %197 : vector<1x256xf32>
    %200 = arith.addf %119, %199 : vector<1x256xf32>
    %cst_30 = arith.constant 0.000000e+00 : f32
    %201 = vector.broadcast %cst_30 : f32 to vector<1x256xf32>
    %202 = vector.extract_strided_slice %36 {offsets = [0, 2], sizes = [2, 256], strides = [1, 1]} : vector<2x358xf32> to vector<2x256xf32>
    %c2 = arith.constant 2 : index
    %203 = memref.load %arg5[%c2] : memref<98xf32, #tpu.memory_space<smem>>
    %c51_31 = arith.constant 51 : index
    %204 = memref.load %arg5[%c51_31] : memref<98xf32, #tpu.memory_space<smem>>
    %205 = vector.extract_strided_slice %202 {offsets = [0, 0], sizes = [1, 256], strides = [1, 1]} : vector<2x256xf32> to vector<1x256xf32>
    %206 = vector.broadcast %203 : f32 to vector<1x256xf32>
    %207 = arith.mulf %206, %205 : vector<1x256xf32>
    %208 = arith.addf %201, %207 : vector<1x256xf32>
    %209 = vector.extract_strided_slice %202 {offsets = [1, 0], sizes = [1, 256], strides = [1, 1]} : vector<2x256xf32> to vector<1x256xf32>
    %210 = vector.broadcast %204 : f32 to vector<1x256xf32>
    %211 = arith.mulf %210, %209 : vector<1x256xf32>
    %212 = arith.addf %208, %211 : vector<1x256xf32>
    %213 = vector.extract_strided_slice %36 {offsets = [0, 18], sizes = [2, 256], strides = [1, 1]} : vector<2x358xf32> to vector<2x256xf32>
    %c9 = arith.constant 9 : index
    %214 = memref.load %arg5[%c9] : memref<98xf32, #tpu.memory_space<smem>>
    %c58 = arith.constant 58 : index
    %215 = memref.load %arg5[%c58] : memref<98xf32, #tpu.memory_space<smem>>
    %216 = vector.extract_strided_slice %213 {offsets = [0, 0], sizes = [1, 256], strides = [1, 1]} : vector<2x256xf32> to vector<1x256xf32>
    %217 = vector.broadcast %214 : f32 to vector<1x256xf32>
    %218 = arith.mulf %217, %216 : vector<1x256xf32>
    %219 = arith.addf %212, %218 : vector<1x256xf32>
    %220 = vector.extract_strided_slice %213 {offsets = [1, 0], sizes = [1, 256], strides = [1, 1]} : vector<2x256xf32> to vector<1x256xf32>
    %221 = vector.broadcast %215 : f32 to vector<1x256xf32>
    %222 = arith.mulf %221, %220 : vector<1x256xf32>
    %223 = arith.addf %219, %222 : vector<1x256xf32>
    %224 = vector.extract_strided_slice %36 {offsets = [0, 34], sizes = [2, 256], strides = [1, 1]} : vector<2x358xf32> to vector<2x256xf32>
    %c16 = arith.constant 16 : index
    %225 = memref.load %arg5[%c16] : memref<98xf32, #tpu.memory_space<smem>>
    %c65 = arith.constant 65 : index
    %226 = memref.load %arg5[%c65] : memref<98xf32, #tpu.memory_space<smem>>
    %227 = vector.extract_strided_slice %224 {offsets = [0, 0], sizes = [1, 256], strides = [1, 1]} : vector<2x256xf32> to vector<1x256xf32>
    %228 = vector.broadcast %225 : f32 to vector<1x256xf32>
    %229 = arith.mulf %228, %227 : vector<1x256xf32>
    %230 = arith.addf %223, %229 : vector<1x256xf32>
    %231 = vector.extract_strided_slice %224 {offsets = [1, 0], sizes = [1, 256], strides = [1, 1]} : vector<2x256xf32> to vector<1x256xf32>
    %232 = vector.broadcast %226 : f32 to vector<1x256xf32>
    %233 = arith.mulf %232, %231 : vector<1x256xf32>
    %234 = arith.addf %230, %233 : vector<1x256xf32>
    %235 = vector.extract_strided_slice %36 {offsets = [0, 50], sizes = [2, 256], strides = [1, 1]} : vector<2x358xf32> to vector<2x256xf32>
    %c23 = arith.constant 23 : index
    %236 = memref.load %arg5[%c23] : memref<98xf32, #tpu.memory_space<smem>>
    %c72 = arith.constant 72 : index
    %237 = memref.load %arg5[%c72] : memref<98xf32, #tpu.memory_space<smem>>
    %238 = vector.extract_strided_slice %235 {offsets = [0, 0], sizes = [1, 256], strides = [1, 1]} : vector<2x256xf32> to vector<1x256xf32>
    %239 = vector.broadcast %236 : f32 to vector<1x256xf32>
    %240 = arith.mulf %239, %238 : vector<1x256xf32>
    %241 = arith.addf %234, %240 : vector<1x256xf32>
    %242 = vector.extract_strided_slice %235 {offsets = [1, 0], sizes = [1, 256], strides = [1, 1]} : vector<2x256xf32> to vector<1x256xf32>
    %243 = vector.broadcast %237 : f32 to vector<1x256xf32>
    %244 = arith.mulf %243, %242 : vector<1x256xf32>
    %245 = arith.addf %241, %244 : vector<1x256xf32>
    %246 = vector.extract_strided_slice %36 {offsets = [0, 66], sizes = [2, 256], strides = [1, 1]} : vector<2x358xf32> to vector<2x256xf32>
    %c30 = arith.constant 30 : index
    %247 = memref.load %arg5[%c30] : memref<98xf32, #tpu.memory_space<smem>>
    %c79 = arith.constant 79 : index
    %248 = memref.load %arg5[%c79] : memref<98xf32, #tpu.memory_space<smem>>
    %249 = vector.extract_strided_slice %246 {offsets = [0, 0], sizes = [1, 256], strides = [1, 1]} : vector<2x256xf32> to vector<1x256xf32>
    %250 = vector.broadcast %247 : f32 to vector<1x256xf32>
    %251 = arith.mulf %250, %249 : vector<1x256xf32>
    %252 = arith.addf %245, %251 : vector<1x256xf32>
    %253 = vector.extract_strided_slice %246 {offsets = [1, 0], sizes = [1, 256], strides = [1, 1]} : vector<2x256xf32> to vector<1x256xf32>
    %254 = vector.broadcast %248 : f32 to vector<1x256xf32>
    %255 = arith.mulf %254, %253 : vector<1x256xf32>
    %256 = arith.addf %252, %255 : vector<1x256xf32>
    %257 = vector.extract_strided_slice %36 {offsets = [0, 82], sizes = [2, 256], strides = [1, 1]} : vector<2x358xf32> to vector<2x256xf32>
    %c37 = arith.constant 37 : index
    %258 = memref.load %arg5[%c37] : memref<98xf32, #tpu.memory_space<smem>>
    %c86 = arith.constant 86 : index
    %259 = memref.load %arg5[%c86] : memref<98xf32, #tpu.memory_space<smem>>
    %260 = vector.extract_strided_slice %257 {offsets = [0, 0], sizes = [1, 256], strides = [1, 1]} : vector<2x256xf32> to vector<1x256xf32>
    %261 = vector.broadcast %258 : f32 to vector<1x256xf32>
    %262 = arith.mulf %261, %260 : vector<1x256xf32>
    %263 = arith.addf %256, %262 : vector<1x256xf32>
    %264 = vector.extract_strided_slice %257 {offsets = [1, 0], sizes = [1, 256], strides = [1, 1]} : vector<2x256xf32> to vector<1x256xf32>
    %265 = vector.broadcast %259 : f32 to vector<1x256xf32>
    %266 = arith.mulf %265, %264 : vector<1x256xf32>
    %267 = arith.addf %263, %266 : vector<1x256xf32>
    %268 = vector.extract_strided_slice %36 {offsets = [0, 98], sizes = [2, 256], strides = [1, 1]} : vector<2x358xf32> to vector<2x256xf32>
    %c44 = arith.constant 44 : index
    %269 = memref.load %arg5[%c44] : memref<98xf32, #tpu.memory_space<smem>>
    %c93 = arith.constant 93 : index
    %270 = memref.load %arg5[%c93] : memref<98xf32, #tpu.memory_space<smem>>
    %271 = vector.extract_strided_slice %268 {offsets = [0, 0], sizes = [1, 256], strides = [1, 1]} : vector<2x256xf32> to vector<1x256xf32>
    %272 = vector.broadcast %269 : f32 to vector<1x256xf32>
    %273 = arith.mulf %272, %271 : vector<1x256xf32>
    %274 = arith.addf %267, %273 : vector<1x256xf32>
    %275 = vector.extract_strided_slice %268 {offsets = [1, 0], sizes = [1, 256], strides = [1, 1]} : vector<2x256xf32> to vector<1x256xf32>
    %276 = vector.broadcast %270 : f32 to vector<1x256xf32>
    %277 = arith.mulf %276, %275 : vector<1x256xf32>
    %278 = arith.addf %274, %277 : vector<1x256xf32>
    %279 = vector.extract_strided_slice %37 {offsets = [2, 0], sizes = [1, 256], strides = [1, 1]} : vector<7x256xf32> to vector<1x256xf32>
    %280 = arith.mulf %279, %278 : vector<1x256xf32>
    %281 = arith.addf %200, %280 : vector<1x256xf32>
    %cst_32 = arith.constant 0.000000e+00 : f32
    %282 = vector.broadcast %cst_32 : f32 to vector<1x256xf32>
    %283 = vector.extract_strided_slice %36 {offsets = [0, 3], sizes = [2, 256], strides = [1, 1]} : vector<2x358xf32> to vector<2x256xf32>
    %c3 = arith.constant 3 : index
    %284 = memref.load %arg5[%c3] : memref<98xf32, #tpu.memory_space<smem>>
    %c52 = arith.constant 52 : index
    %285 = memref.load %arg5[%c52] : memref<98xf32, #tpu.memory_space<smem>>
    %286 = vector.extract_strided_slice %283 {offsets = [0, 0], sizes = [1, 256], strides = [1, 1]} : vector<2x256xf32> to vector<1x256xf32>
    %287 = vector.broadcast %284 : f32 to vector<1x256xf32>
    %288 = arith.mulf %287, %286 : vector<1x256xf32>
    %289 = arith.addf %282, %288 : vector<1x256xf32>
    %290 = vector.extract_strided_slice %283 {offsets = [1, 0], sizes = [1, 256], strides = [1, 1]} : vector<2x256xf32> to vector<1x256xf32>
    %291 = vector.broadcast %285 : f32 to vector<1x256xf32>
    %292 = arith.mulf %291, %290 : vector<1x256xf32>
    %293 = arith.addf %289, %292 : vector<1x256xf32>
    %294 = vector.extract_strided_slice %36 {offsets = [0, 19], sizes = [2, 256], strides = [1, 1]} : vector<2x358xf32> to vector<2x256xf32>
    %c10 = arith.constant 10 : index
    %295 = memref.load %arg5[%c10] : memref<98xf32, #tpu.memory_space<smem>>
    %c59 = arith.constant 59 : index
    %296 = memref.load %arg5[%c59] : memref<98xf32, #tpu.memory_space<smem>>
    %297 = vector.extract_strided_slice %294 {offsets = [0, 0], sizes = [1, 256], strides = [1, 1]} : vector<2x256xf32> to vector<1x256xf32>
    %298 = vector.broadcast %295 : f32 to vector<1x256xf32>
    %299 = arith.mulf %298, %297 : vector<1x256xf32>
    %300 = arith.addf %293, %299 : vector<1x256xf32>
    %301 = vector.extract_strided_slice %294 {offsets = [1, 0], sizes = [1, 256], strides = [1, 1]} : vector<2x256xf32> to vector<1x256xf32>
    %302 = vector.broadcast %296 : f32 to vector<1x256xf32>
    %303 = arith.mulf %302, %301 : vector<1x256xf32>
    %304 = arith.addf %300, %303 : vector<1x256xf32>
    %305 = vector.extract_strided_slice %36 {offsets = [0, 35], sizes = [2, 256], strides = [1, 1]} : vector<2x358xf32> to vector<2x256xf32>
    %c17 = arith.constant 17 : index
    %306 = memref.load %arg5[%c17] : memref<98xf32, #tpu.memory_space<smem>>
    %c66 = arith.constant 66 : index
    %307 = memref.load %arg5[%c66] : memref<98xf32, #tpu.memory_space<smem>>
    %308 = vector.extract_strided_slice %305 {offsets = [0, 0], sizes = [1, 256], strides = [1, 1]} : vector<2x256xf32> to vector<1x256xf32>
    %309 = vector.broadcast %306 : f32 to vector<1x256xf32>
    %310 = arith.mulf %309, %308 : vector<1x256xf32>
    %311 = arith.addf %304, %310 : vector<1x256xf32>
    %312 = vector.extract_strided_slice %305 {offsets = [1, 0], sizes = [1, 256], strides = [1, 1]} : vector<2x256xf32> to vector<1x256xf32>
    %313 = vector.broadcast %307 : f32 to vector<1x256xf32>
    %314 = arith.mulf %313, %312 : vector<1x256xf32>
    %315 = arith.addf %311, %314 : vector<1x256xf32>
    %316 = vector.extract_strided_slice %36 {offsets = [0, 51], sizes = [2, 256], strides = [1, 1]} : vector<2x358xf32> to vector<2x256xf32>
    %c24 = arith.constant 24 : index
    %317 = memref.load %arg5[%c24] : memref<98xf32, #tpu.memory_space<smem>>
    %c73 = arith.constant 73 : index
    %318 = memref.load %arg5[%c73] : memref<98xf32, #tpu.memory_space<smem>>
    %319 = vector.extract_strided_slice %316 {offsets = [0, 0], sizes = [1, 256], strides = [1, 1]} : vector<2x256xf32> to vector<1x256xf32>
    %320 = vector.broadcast %317 : f32 to vector<1x256xf32>
    %321 = arith.mulf %320, %319 : vector<1x256xf32>
    %322 = arith.addf %315, %321 : vector<1x256xf32>
    %323 = vector.extract_strided_slice %316 {offsets = [1, 0], sizes = [1, 256], strides = [1, 1]} : vector<2x256xf32> to vector<1x256xf32>
    %324 = vector.broadcast %318 : f32 to vector<1x256xf32>
    %325 = arith.mulf %324, %323 : vector<1x256xf32>
    %326 = arith.addf %322, %325 : vector<1x256xf32>
    %327 = vector.extract_strided_slice %36 {offsets = [0, 67], sizes = [2, 256], strides = [1, 1]} : vector<2x358xf32> to vector<2x256xf32>
    %c31 = arith.constant 31 : index
    %328 = memref.load %arg5[%c31] : memref<98xf32, #tpu.memory_space<smem>>
    %c80 = arith.constant 80 : index
    %329 = memref.load %arg5[%c80] : memref<98xf32, #tpu.memory_space<smem>>
    %330 = vector.extract_strided_slice %327 {offsets = [0, 0], sizes = [1, 256], strides = [1, 1]} : vector<2x256xf32> to vector<1x256xf32>
    %331 = vector.broadcast %328 : f32 to vector<1x256xf32>
    %332 = arith.mulf %331, %330 : vector<1x256xf32>
    %333 = arith.addf %326, %332 : vector<1x256xf32>
    %334 = vector.extract_strided_slice %327 {offsets = [1, 0], sizes = [1, 256], strides = [1, 1]} : vector<2x256xf32> to vector<1x256xf32>
    %335 = vector.broadcast %329 : f32 to vector<1x256xf32>
    %336 = arith.mulf %335, %334 : vector<1x256xf32>
    %337 = arith.addf %333, %336 : vector<1x256xf32>
    %338 = vector.extract_strided_slice %36 {offsets = [0, 83], sizes = [2, 256], strides = [1, 1]} : vector<2x358xf32> to vector<2x256xf32>
    %c38 = arith.constant 38 : index
    %339 = memref.load %arg5[%c38] : memref<98xf32, #tpu.memory_space<smem>>
    %c87 = arith.constant 87 : index
    %340 = memref.load %arg5[%c87] : memref<98xf32, #tpu.memory_space<smem>>
    %341 = vector.extract_strided_slice %338 {offsets = [0, 0], sizes = [1, 256], strides = [1, 1]} : vector<2x256xf32> to vector<1x256xf32>
    %342 = vector.broadcast %339 : f32 to vector<1x256xf32>
    %343 = arith.mulf %342, %341 : vector<1x256xf32>
    %344 = arith.addf %337, %343 : vector<1x256xf32>
    %345 = vector.extract_strided_slice %338 {offsets = [1, 0], sizes = [1, 256], strides = [1, 1]} : vector<2x256xf32> to vector<1x256xf32>
    %346 = vector.broadcast %340 : f32 to vector<1x256xf32>
    %347 = arith.mulf %346, %345 : vector<1x256xf32>
    %348 = arith.addf %344, %347 : vector<1x256xf32>
    %349 = vector.extract_strided_slice %36 {offsets = [0, 99], sizes = [2, 256], strides = [1, 1]} : vector<2x358xf32> to vector<2x256xf32>
    %c45 = arith.constant 45 : index
    %350 = memref.load %arg5[%c45] : memref<98xf32, #tpu.memory_space<smem>>
    %c94 = arith.constant 94 : index
    %351 = memref.load %arg5[%c94] : memref<98xf32, #tpu.memory_space<smem>>
    %352 = vector.extract_strided_slice %349 {offsets = [0, 0], sizes = [1, 256], strides = [1, 1]} : vector<2x256xf32> to vector<1x256xf32>
    %353 = vector.broadcast %350 : f32 to vector<1x256xf32>
    %354 = arith.mulf %353, %352 : vector<1x256xf32>
    %355 = arith.addf %348, %354 : vector<1x256xf32>
    %356 = vector.extract_strided_slice %349 {offsets = [1, 0], sizes = [1, 256], strides = [1, 1]} : vector<2x256xf32> to vector<1x256xf32>
    %357 = vector.broadcast %351 : f32 to vector<1x256xf32>
    %358 = arith.mulf %357, %356 : vector<1x256xf32>
    %359 = arith.addf %355, %358 : vector<1x256xf32>
    %360 = vector.extract_strided_slice %37 {offsets = [3, 0], sizes = [1, 256], strides = [1, 1]} : vector<7x256xf32> to vector<1x256xf32>
    %361 = arith.mulf %360, %359 : vector<1x256xf32>
    %362 = arith.addf %281, %361 : vector<1x256xf32>
    %cst_33 = arith.constant 0.000000e+00 : f32
    %363 = vector.broadcast %cst_33 : f32 to vector<1x256xf32>
    %364 = vector.extract_strided_slice %36 {offsets = [0, 4], sizes = [2, 256], strides = [1, 1]} : vector<2x358xf32> to vector<2x256xf32>
    %c4 = arith.constant 4 : index
    %365 = memref.load %arg5[%c4] : memref<98xf32, #tpu.memory_space<smem>>
    %c53 = arith.constant 53 : index
    %366 = memref.load %arg5[%c53] : memref<98xf32, #tpu.memory_space<smem>>
    %367 = vector.extract_strided_slice %364 {offsets = [0, 0], sizes = [1, 256], strides = [1, 1]} : vector<2x256xf32> to vector<1x256xf32>
    %368 = vector.broadcast %365 : f32 to vector<1x256xf32>
    %369 = arith.mulf %368, %367 : vector<1x256xf32>
    %370 = arith.addf %363, %369 : vector<1x256xf32>
    %371 = vector.extract_strided_slice %364 {offsets = [1, 0], sizes = [1, 256], strides = [1, 1]} : vector<2x256xf32> to vector<1x256xf32>
    %372 = vector.broadcast %366 : f32 to vector<1x256xf32>
    %373 = arith.mulf %372, %371 : vector<1x256xf32>
    %374 = arith.addf %370, %373 : vector<1x256xf32>
    %375 = vector.extract_strided_slice %36 {offsets = [0, 20], sizes = [2, 256], strides = [1, 1]} : vector<2x358xf32> to vector<2x256xf32>
    %c11 = arith.constant 11 : index
    %376 = memref.load %arg5[%c11] : memref<98xf32, #tpu.memory_space<smem>>
    %c60 = arith.constant 60 : index
    %377 = memref.load %arg5[%c60] : memref<98xf32, #tpu.memory_space<smem>>
    %378 = vector.extract_strided_slice %375 {offsets = [0, 0], sizes = [1, 256], strides = [1, 1]} : vector<2x256xf32> to vector<1x256xf32>
    %379 = vector.broadcast %376 : f32 to vector<1x256xf32>
    %380 = arith.mulf %379, %378 : vector<1x256xf32>
    %381 = arith.addf %374, %380 : vector<1x256xf32>
    %382 = vector.extract_strided_slice %375 {offsets = [1, 0], sizes = [1, 256], strides = [1, 1]} : vector<2x256xf32> to vector<1x256xf32>
    %383 = vector.broadcast %377 : f32 to vector<1x256xf32>
    %384 = arith.mulf %383, %382 : vector<1x256xf32>
    %385 = arith.addf %381, %384 : vector<1x256xf32>
    %386 = vector.extract_strided_slice %36 {offsets = [0, 36], sizes = [2, 256], strides = [1, 1]} : vector<2x358xf32> to vector<2x256xf32>
    %c18 = arith.constant 18 : index
    %387 = memref.load %arg5[%c18] : memref<98xf32, #tpu.memory_space<smem>>
    %c67 = arith.constant 67 : index
    %388 = memref.load %arg5[%c67] : memref<98xf32, #tpu.memory_space<smem>>
    %389 = vector.extract_strided_slice %386 {offsets = [0, 0], sizes = [1, 256], strides = [1, 1]} : vector<2x256xf32> to vector<1x256xf32>
    %390 = vector.broadcast %387 : f32 to vector<1x256xf32>
    %391 = arith.mulf %390, %389 : vector<1x256xf32>
    %392 = arith.addf %385, %391 : vector<1x256xf32>
    %393 = vector.extract_strided_slice %386 {offsets = [1, 0], sizes = [1, 256], strides = [1, 1]} : vector<2x256xf32> to vector<1x256xf32>
    %394 = vector.broadcast %388 : f32 to vector<1x256xf32>
    %395 = arith.mulf %394, %393 : vector<1x256xf32>
    %396 = arith.addf %392, %395 : vector<1x256xf32>
    %397 = vector.extract_strided_slice %36 {offsets = [0, 52], sizes = [2, 256], strides = [1, 1]} : vector<2x358xf32> to vector<2x256xf32>
    %c25 = arith.constant 25 : index
    %398 = memref.load %arg5[%c25] : memref<98xf32, #tpu.memory_space<smem>>
    %c74 = arith.constant 74 : index
    %399 = memref.load %arg5[%c74] : memref<98xf32, #tpu.memory_space<smem>>
    %400 = vector.extract_strided_slice %397 {offsets = [0, 0], sizes = [1, 256], strides = [1, 1]} : vector<2x256xf32> to vector<1x256xf32>
    %401 = vector.broadcast %398 : f32 to vector<1x256xf32>
    %402 = arith.mulf %401, %400 : vector<1x256xf32>
    %403 = arith.addf %396, %402 : vector<1x256xf32>
    %404 = vector.extract_strided_slice %397 {offsets = [1, 0], sizes = [1, 256], strides = [1, 1]} : vector<2x256xf32> to vector<1x256xf32>
    %405 = vector.broadcast %399 : f32 to vector<1x256xf32>
    %406 = arith.mulf %405, %404 : vector<1x256xf32>
    %407 = arith.addf %403, %406 : vector<1x256xf32>
    %408 = vector.extract_strided_slice %36 {offsets = [0, 68], sizes = [2, 256], strides = [1, 1]} : vector<2x358xf32> to vector<2x256xf32>
    %c32 = arith.constant 32 : index
    %409 = memref.load %arg5[%c32] : memref<98xf32, #tpu.memory_space<smem>>
    %c81 = arith.constant 81 : index
    %410 = memref.load %arg5[%c81] : memref<98xf32, #tpu.memory_space<smem>>
    %411 = vector.extract_strided_slice %408 {offsets = [0, 0], sizes = [1, 256], strides = [1, 1]} : vector<2x256xf32> to vector<1x256xf32>
    %412 = vector.broadcast %409 : f32 to vector<1x256xf32>
    %413 = arith.mulf %412, %411 : vector<1x256xf32>
    %414 = arith.addf %407, %413 : vector<1x256xf32>
    %415 = vector.extract_strided_slice %408 {offsets = [1, 0], sizes = [1, 256], strides = [1, 1]} : vector<2x256xf32> to vector<1x256xf32>
    %416 = vector.broadcast %410 : f32 to vector<1x256xf32>
    %417 = arith.mulf %416, %415 : vector<1x256xf32>
    %418 = arith.addf %414, %417 : vector<1x256xf32>
    %419 = vector.extract_strided_slice %36 {offsets = [0, 84], sizes = [2, 256], strides = [1, 1]} : vector<2x358xf32> to vector<2x256xf32>
    %c39 = arith.constant 39 : index
    %420 = memref.load %arg5[%c39] : memref<98xf32, #tpu.memory_space<smem>>
    %c88 = arith.constant 88 : index
    %421 = memref.load %arg5[%c88] : memref<98xf32, #tpu.memory_space<smem>>
    %422 = vector.extract_strided_slice %419 {offsets = [0, 0], sizes = [1, 256], strides = [1, 1]} : vector<2x256xf32> to vector<1x256xf32>
    %423 = vector.broadcast %420 : f32 to vector<1x256xf32>
    %424 = arith.mulf %423, %422 : vector<1x256xf32>
    %425 = arith.addf %418, %424 : vector<1x256xf32>
    %426 = vector.extract_strided_slice %419 {offsets = [1, 0], sizes = [1, 256], strides = [1, 1]} : vector<2x256xf32> to vector<1x256xf32>
    %427 = vector.broadcast %421 : f32 to vector<1x256xf32>
    %428 = arith.mulf %427, %426 : vector<1x256xf32>
    %429 = arith.addf %425, %428 : vector<1x256xf32>
    %430 = vector.extract_strided_slice %36 {offsets = [0, 100], sizes = [2, 256], strides = [1, 1]} : vector<2x358xf32> to vector<2x256xf32>
    %c46 = arith.constant 46 : index
    %431 = memref.load %arg5[%c46] : memref<98xf32, #tpu.memory_space<smem>>
    %c95 = arith.constant 95 : index
    %432 = memref.load %arg5[%c95] : memref<98xf32, #tpu.memory_space<smem>>
    %433 = vector.extract_strided_slice %430 {offsets = [0, 0], sizes = [1, 256], strides = [1, 1]} : vector<2x256xf32> to vector<1x256xf32>
    %434 = vector.broadcast %431 : f32 to vector<1x256xf32>
    %435 = arith.mulf %434, %433 : vector<1x256xf32>
    %436 = arith.addf %429, %435 : vector<1x256xf32>
    %437 = vector.extract_strided_slice %430 {offsets = [1, 0], sizes = [1, 256], strides = [1, 1]} : vector<2x256xf32> to vector<1x256xf32>
    %438 = vector.broadcast %432 : f32 to vector<1x256xf32>
    %439 = arith.mulf %438, %437 : vector<1x256xf32>
    %440 = arith.addf %436, %439 : vector<1x256xf32>
    %441 = vector.extract_strided_slice %37 {offsets = [4, 0], sizes = [1, 256], strides = [1, 1]} : vector<7x256xf32> to vector<1x256xf32>
    %442 = arith.mulf %441, %440 : vector<1x256xf32>
    %443 = arith.addf %362, %442 : vector<1x256xf32>
    %cst_34 = arith.constant 0.000000e+00 : f32
    %444 = vector.broadcast %cst_34 : f32 to vector<1x256xf32>
    %445 = vector.extract_strided_slice %36 {offsets = [0, 5], sizes = [2, 256], strides = [1, 1]} : vector<2x358xf32> to vector<2x256xf32>
    %c5 = arith.constant 5 : index
    %446 = memref.load %arg5[%c5] : memref<98xf32, #tpu.memory_space<smem>>
    %c54 = arith.constant 54 : index
    %447 = memref.load %arg5[%c54] : memref<98xf32, #tpu.memory_space<smem>>
    %448 = vector.extract_strided_slice %445 {offsets = [0, 0], sizes = [1, 256], strides = [1, 1]} : vector<2x256xf32> to vector<1x256xf32>
    %449 = vector.broadcast %446 : f32 to vector<1x256xf32>
    %450 = arith.mulf %449, %448 : vector<1x256xf32>
    %451 = arith.addf %444, %450 : vector<1x256xf32>
    %452 = vector.extract_strided_slice %445 {offsets = [1, 0], sizes = [1, 256], strides = [1, 1]} : vector<2x256xf32> to vector<1x256xf32>
    %453 = vector.broadcast %447 : f32 to vector<1x256xf32>
    %454 = arith.mulf %453, %452 : vector<1x256xf32>
    %455 = arith.addf %451, %454 : vector<1x256xf32>
    %456 = vector.extract_strided_slice %36 {offsets = [0, 21], sizes = [2, 256], strides = [1, 1]} : vector<2x358xf32> to vector<2x256xf32>
    %c12 = arith.constant 12 : index
    %457 = memref.load %arg5[%c12] : memref<98xf32, #tpu.memory_space<smem>>
    %c61 = arith.constant 61 : index
    %458 = memref.load %arg5[%c61] : memref<98xf32, #tpu.memory_space<smem>>
    %459 = vector.extract_strided_slice %456 {offsets = [0, 0], sizes = [1, 256], strides = [1, 1]} : vector<2x256xf32> to vector<1x256xf32>
    %460 = vector.broadcast %457 : f32 to vector<1x256xf32>
    %461 = arith.mulf %460, %459 : vector<1x256xf32>
    %462 = arith.addf %455, %461 : vector<1x256xf32>
    %463 = vector.extract_strided_slice %456 {offsets = [1, 0], sizes = [1, 256], strides = [1, 1]} : vector<2x256xf32> to vector<1x256xf32>
    %464 = vector.broadcast %458 : f32 to vector<1x256xf32>
    %465 = arith.mulf %464, %463 : vector<1x256xf32>
    %466 = arith.addf %462, %465 : vector<1x256xf32>
    %467 = vector.extract_strided_slice %36 {offsets = [0, 37], sizes = [2, 256], strides = [1, 1]} : vector<2x358xf32> to vector<2x256xf32>
    %c19 = arith.constant 19 : index
    %468 = memref.load %arg5[%c19] : memref<98xf32, #tpu.memory_space<smem>>
    %c68 = arith.constant 68 : index
    %469 = memref.load %arg5[%c68] : memref<98xf32, #tpu.memory_space<smem>>
    %470 = vector.extract_strided_slice %467 {offsets = [0, 0], sizes = [1, 256], strides = [1, 1]} : vector<2x256xf32> to vector<1x256xf32>
    %471 = vector.broadcast %468 : f32 to vector<1x256xf32>
    %472 = arith.mulf %471, %470 : vector<1x256xf32>
    %473 = arith.addf %466, %472 : vector<1x256xf32>
    %474 = vector.extract_strided_slice %467 {offsets = [1, 0], sizes = [1, 256], strides = [1, 1]} : vector<2x256xf32> to vector<1x256xf32>
    %475 = vector.broadcast %469 : f32 to vector<1x256xf32>
    %476 = arith.mulf %475, %474 : vector<1x256xf32>
    %477 = arith.addf %473, %476 : vector<1x256xf32>
    %478 = vector.extract_strided_slice %36 {offsets = [0, 53], sizes = [2, 256], strides = [1, 1]} : vector<2x358xf32> to vector<2x256xf32>
    %c26 = arith.constant 26 : index
    %479 = memref.load %arg5[%c26] : memref<98xf32, #tpu.memory_space<smem>>
    %c75 = arith.constant 75 : index
    %480 = memref.load %arg5[%c75] : memref<98xf32, #tpu.memory_space<smem>>
    %481 = vector.extract_strided_slice %478 {offsets = [0, 0], sizes = [1, 256], strides = [1, 1]} : vector<2x256xf32> to vector<1x256xf32>
    %482 = vector.broadcast %479 : f32 to vector<1x256xf32>
    %483 = arith.mulf %482, %481 : vector<1x256xf32>
    %484 = arith.addf %477, %483 : vector<1x256xf32>
    %485 = vector.extract_strided_slice %478 {offsets = [1, 0], sizes = [1, 256], strides = [1, 1]} : vector<2x256xf32> to vector<1x256xf32>
    %486 = vector.broadcast %480 : f32 to vector<1x256xf32>
    %487 = arith.mulf %486, %485 : vector<1x256xf32>
    %488 = arith.addf %484, %487 : vector<1x256xf32>
    %489 = vector.extract_strided_slice %36 {offsets = [0, 69], sizes = [2, 256], strides = [1, 1]} : vector<2x358xf32> to vector<2x256xf32>
    %c33 = arith.constant 33 : index
    %490 = memref.load %arg5[%c33] : memref<98xf32, #tpu.memory_space<smem>>
    %c82 = arith.constant 82 : index
    %491 = memref.load %arg5[%c82] : memref<98xf32, #tpu.memory_space<smem>>
    %492 = vector.extract_strided_slice %489 {offsets = [0, 0], sizes = [1, 256], strides = [1, 1]} : vector<2x256xf32> to vector<1x256xf32>
    %493 = vector.broadcast %490 : f32 to vector<1x256xf32>
    %494 = arith.mulf %493, %492 : vector<1x256xf32>
    %495 = arith.addf %488, %494 : vector<1x256xf32>
    %496 = vector.extract_strided_slice %489 {offsets = [1, 0], sizes = [1, 256], strides = [1, 1]} : vector<2x256xf32> to vector<1x256xf32>
    %497 = vector.broadcast %491 : f32 to vector<1x256xf32>
    %498 = arith.mulf %497, %496 : vector<1x256xf32>
    %499 = arith.addf %495, %498 : vector<1x256xf32>
    %500 = vector.extract_strided_slice %36 {offsets = [0, 85], sizes = [2, 256], strides = [1, 1]} : vector<2x358xf32> to vector<2x256xf32>
    %c40 = arith.constant 40 : index
    %501 = memref.load %arg5[%c40] : memref<98xf32, #tpu.memory_space<smem>>
    %c89 = arith.constant 89 : index
    %502 = memref.load %arg5[%c89] : memref<98xf32, #tpu.memory_space<smem>>
    %503 = vector.extract_strided_slice %500 {offsets = [0, 0], sizes = [1, 256], strides = [1, 1]} : vector<2x256xf32> to vector<1x256xf32>
    %504 = vector.broadcast %501 : f32 to vector<1x256xf32>
    %505 = arith.mulf %504, %503 : vector<1x256xf32>
    %506 = arith.addf %499, %505 : vector<1x256xf32>
    %507 = vector.extract_strided_slice %500 {offsets = [1, 0], sizes = [1, 256], strides = [1, 1]} : vector<2x256xf32> to vector<1x256xf32>
    %508 = vector.broadcast %502 : f32 to vector<1x256xf32>
    %509 = arith.mulf %508, %507 : vector<1x256xf32>
    %510 = arith.addf %506, %509 : vector<1x256xf32>
    %511 = vector.extract_strided_slice %36 {offsets = [0, 101], sizes = [2, 256], strides = [1, 1]} : vector<2x358xf32> to vector<2x256xf32>
    %c47 = arith.constant 47 : index
    %512 = memref.load %arg5[%c47] : memref<98xf32, #tpu.memory_space<smem>>
    %c96 = arith.constant 96 : index
    %513 = memref.load %arg5[%c96] : memref<98xf32, #tpu.memory_space<smem>>
    %514 = vector.extract_strided_slice %511 {offsets = [0, 0], sizes = [1, 256], strides = [1, 1]} : vector<2x256xf32> to vector<1x256xf32>
    %515 = vector.broadcast %512 : f32 to vector<1x256xf32>
    %516 = arith.mulf %515, %514 : vector<1x256xf32>
    %517 = arith.addf %510, %516 : vector<1x256xf32>
    %518 = vector.extract_strided_slice %511 {offsets = [1, 0], sizes = [1, 256], strides = [1, 1]} : vector<2x256xf32> to vector<1x256xf32>
    %519 = vector.broadcast %513 : f32 to vector<1x256xf32>
    %520 = arith.mulf %519, %518 : vector<1x256xf32>
    %521 = arith.addf %517, %520 : vector<1x256xf32>
    %522 = vector.extract_strided_slice %37 {offsets = [5, 0], sizes = [1, 256], strides = [1, 1]} : vector<7x256xf32> to vector<1x256xf32>
    %523 = arith.mulf %522, %521 : vector<1x256xf32>
    %524 = arith.addf %443, %523 : vector<1x256xf32>
    %cst_35 = arith.constant 0.000000e+00 : f32
    %525 = vector.broadcast %cst_35 : f32 to vector<1x256xf32>
    %526 = vector.extract_strided_slice %36 {offsets = [0, 6], sizes = [2, 256], strides = [1, 1]} : vector<2x358xf32> to vector<2x256xf32>
    %c6 = arith.constant 6 : index
    %527 = memref.load %arg5[%c6] : memref<98xf32, #tpu.memory_space<smem>>
    %c55 = arith.constant 55 : index
    %528 = memref.load %arg5[%c55] : memref<98xf32, #tpu.memory_space<smem>>
    %529 = vector.extract_strided_slice %526 {offsets = [0, 0], sizes = [1, 256], strides = [1, 1]} : vector<2x256xf32> to vector<1x256xf32>
    %530 = vector.broadcast %527 : f32 to vector<1x256xf32>
    %531 = arith.mulf %530, %529 : vector<1x256xf32>
    %532 = arith.addf %525, %531 : vector<1x256xf32>
    %533 = vector.extract_strided_slice %526 {offsets = [1, 0], sizes = [1, 256], strides = [1, 1]} : vector<2x256xf32> to vector<1x256xf32>
    %534 = vector.broadcast %528 : f32 to vector<1x256xf32>
    %535 = arith.mulf %534, %533 : vector<1x256xf32>
    %536 = arith.addf %532, %535 : vector<1x256xf32>
    %537 = vector.extract_strided_slice %36 {offsets = [0, 22], sizes = [2, 256], strides = [1, 1]} : vector<2x358xf32> to vector<2x256xf32>
    %c13 = arith.constant 13 : index
    %538 = memref.load %arg5[%c13] : memref<98xf32, #tpu.memory_space<smem>>
    %c62 = arith.constant 62 : index
    %539 = memref.load %arg5[%c62] : memref<98xf32, #tpu.memory_space<smem>>
    %540 = vector.extract_strided_slice %537 {offsets = [0, 0], sizes = [1, 256], strides = [1, 1]} : vector<2x256xf32> to vector<1x256xf32>
    %541 = vector.broadcast %538 : f32 to vector<1x256xf32>
    %542 = arith.mulf %541, %540 : vector<1x256xf32>
    %543 = arith.addf %536, %542 : vector<1x256xf32>
    %544 = vector.extract_strided_slice %537 {offsets = [1, 0], sizes = [1, 256], strides = [1, 1]} : vector<2x256xf32> to vector<1x256xf32>
    %545 = vector.broadcast %539 : f32 to vector<1x256xf32>
    %546 = arith.mulf %545, %544 : vector<1x256xf32>
    %547 = arith.addf %543, %546 : vector<1x256xf32>
    %548 = vector.extract_strided_slice %36 {offsets = [0, 38], sizes = [2, 256], strides = [1, 1]} : vector<2x358xf32> to vector<2x256xf32>
    %c20 = arith.constant 20 : index
    %549 = memref.load %arg5[%c20] : memref<98xf32, #tpu.memory_space<smem>>
    %c69 = arith.constant 69 : index
    %550 = memref.load %arg5[%c69] : memref<98xf32, #tpu.memory_space<smem>>
    %551 = vector.extract_strided_slice %548 {offsets = [0, 0], sizes = [1, 256], strides = [1, 1]} : vector<2x256xf32> to vector<1x256xf32>
    %552 = vector.broadcast %549 : f32 to vector<1x256xf32>
    %553 = arith.mulf %552, %551 : vector<1x256xf32>
    %554 = arith.addf %547, %553 : vector<1x256xf32>
    %555 = vector.extract_strided_slice %548 {offsets = [1, 0], sizes = [1, 256], strides = [1, 1]} : vector<2x256xf32> to vector<1x256xf32>
    %556 = vector.broadcast %550 : f32 to vector<1x256xf32>
    %557 = arith.mulf %556, %555 : vector<1x256xf32>
    %558 = arith.addf %554, %557 : vector<1x256xf32>
    %559 = vector.extract_strided_slice %36 {offsets = [0, 54], sizes = [2, 256], strides = [1, 1]} : vector<2x358xf32> to vector<2x256xf32>
    %c27 = arith.constant 27 : index
    %560 = memref.load %arg5[%c27] : memref<98xf32, #tpu.memory_space<smem>>
    %c76 = arith.constant 76 : index
    %561 = memref.load %arg5[%c76] : memref<98xf32, #tpu.memory_space<smem>>
    %562 = vector.extract_strided_slice %559 {offsets = [0, 0], sizes = [1, 256], strides = [1, 1]} : vector<2x256xf32> to vector<1x256xf32>
    %563 = vector.broadcast %560 : f32 to vector<1x256xf32>
    %564 = arith.mulf %563, %562 : vector<1x256xf32>
    %565 = arith.addf %558, %564 : vector<1x256xf32>
    %566 = vector.extract_strided_slice %559 {offsets = [1, 0], sizes = [1, 256], strides = [1, 1]} : vector<2x256xf32> to vector<1x256xf32>
    %567 = vector.broadcast %561 : f32 to vector<1x256xf32>
    %568 = arith.mulf %567, %566 : vector<1x256xf32>
    %569 = arith.addf %565, %568 : vector<1x256xf32>
    %570 = vector.extract_strided_slice %36 {offsets = [0, 70], sizes = [2, 256], strides = [1, 1]} : vector<2x358xf32> to vector<2x256xf32>
    %c34 = arith.constant 34 : index
    %571 = memref.load %arg5[%c34] : memref<98xf32, #tpu.memory_space<smem>>
    %c83 = arith.constant 83 : index
    %572 = memref.load %arg5[%c83] : memref<98xf32, #tpu.memory_space<smem>>
    %573 = vector.extract_strided_slice %570 {offsets = [0, 0], sizes = [1, 256], strides = [1, 1]} : vector<2x256xf32> to vector<1x256xf32>
    %574 = vector.broadcast %571 : f32 to vector<1x256xf32>
    %575 = arith.mulf %574, %573 : vector<1x256xf32>
    %576 = arith.addf %569, %575 : vector<1x256xf32>
    %577 = vector.extract_strided_slice %570 {offsets = [1, 0], sizes = [1, 256], strides = [1, 1]} : vector<2x256xf32> to vector<1x256xf32>
    %578 = vector.broadcast %572 : f32 to vector<1x256xf32>
    %579 = arith.mulf %578, %577 : vector<1x256xf32>
    %580 = arith.addf %576, %579 : vector<1x256xf32>
    %581 = vector.extract_strided_slice %36 {offsets = [0, 86], sizes = [2, 256], strides = [1, 1]} : vector<2x358xf32> to vector<2x256xf32>
    %c41 = arith.constant 41 : index
    %582 = memref.load %arg5[%c41] : memref<98xf32, #tpu.memory_space<smem>>
    %c90 = arith.constant 90 : index
    %583 = memref.load %arg5[%c90] : memref<98xf32, #tpu.memory_space<smem>>
    %584 = vector.extract_strided_slice %581 {offsets = [0, 0], sizes = [1, 256], strides = [1, 1]} : vector<2x256xf32> to vector<1x256xf32>
    %585 = vector.broadcast %582 : f32 to vector<1x256xf32>
    %586 = arith.mulf %585, %584 : vector<1x256xf32>
    %587 = arith.addf %580, %586 : vector<1x256xf32>
    %588 = vector.extract_strided_slice %581 {offsets = [1, 0], sizes = [1, 256], strides = [1, 1]} : vector<2x256xf32> to vector<1x256xf32>
    %589 = vector.broadcast %583 : f32 to vector<1x256xf32>
    %590 = arith.mulf %589, %588 : vector<1x256xf32>
    %591 = arith.addf %587, %590 : vector<1x256xf32>
    %592 = vector.extract_strided_slice %36 {offsets = [0, 102], sizes = [2, 256], strides = [1, 1]} : vector<2x358xf32> to vector<2x256xf32>
    %c48 = arith.constant 48 : index
    %593 = memref.load %arg5[%c48] : memref<98xf32, #tpu.memory_space<smem>>
    %c97 = arith.constant 97 : index
    %594 = memref.load %arg5[%c97] : memref<98xf32, #tpu.memory_space<smem>>
    %595 = vector.extract_strided_slice %592 {offsets = [0, 0], sizes = [1, 256], strides = [1, 1]} : vector<2x256xf32> to vector<1x256xf32>
    %596 = vector.broadcast %593 : f32 to vector<1x256xf32>
    %597 = arith.mulf %596, %595 : vector<1x256xf32>
    %598 = arith.addf %591, %597 : vector<1x256xf32>
    %599 = vector.extract_strided_slice %592 {offsets = [1, 0], sizes = [1, 256], strides = [1, 1]} : vector<2x256xf32> to vector<1x256xf32>
    %600 = vector.broadcast %594 : f32 to vector<1x256xf32>
    %601 = arith.mulf %600, %599 : vector<1x256xf32>
    %602 = arith.addf %598, %601 : vector<1x256xf32>
    %603 = vector.extract_strided_slice %37 {offsets = [6, 0], sizes = [1, 256], strides = [1, 1]} : vector<7x256xf32> to vector<1x256xf32>
    %604 = arith.mulf %603, %602 : vector<1x256xf32>
    %605 = arith.addf %524, %604 : vector<1x256xf32>
    %606 = arith.negf %605 : vector<1x256xf32>
    %607 = math.exp %606 : vector<1x256xf32>
    %cst_36 = arith.constant 1.000000e+00 : f32
    %608 = vector.broadcast %cst_36 : f32 to vector<1x256xf32>
    %609 = arith.addf %608, %607 : vector<1x256xf32>
    %610 = arith.divf %608, %609 : vector<1x256xf32>
    %611 = vector.broadcast %610 : vector<1x256xf32> to vector<32x256xf32>
    %612 = arith.mulf %24, %611 : vector<32x256xf32>
    %c0_37 = arith.constant 0 : index
    %c0_38 = arith.constant 0 : index
    %c0_39 = arith.constant 0 : index
    %613 = vector.load %arg6[%c0_37, %c0_38, %c0_39] : memref<1x32x256xf32, #tpu.memory_space<vmem>>, vector<1x32x256xf32>
    %614 = vector.shape_cast %613 : vector<1x32x256xf32> to vector<32x256xf32>
    %615 = vector.shape_cast %612 : vector<32x256xf32> to vector<1x32x256xf32>
    tpu.vector_store %arg6[%c0_37, %c0_38, %c0_39], %615 {strides = array<i32>} : memref<1x32x256xf32, #tpu.memory_space<vmem>>, vector<1x32x256xf32>,
    return
  }
  func.func @transform_0(%arg0: i32) -> (i32, i32, i32) {
    %c0_i32 = arith.constant 0 : i32
    %c0_i32_0 = arith.constant 0 : i32
    %c0_i32_1 = arith.constant 0 : i32
    return %arg0, %c0_i32, %c0_i32_0 : i32, i32, i32
  }
  func.func @transform_1(%arg0: i32) -> (i32, i32) {
    %c0_i32 = arith.constant 0 : i32
    %c0_i32_0 = arith.constant 0 : i32
    %c0_i32_1 = arith.constant 0 : i32
    return %c0_i32, %c0_i32_0 : i32, i32
  }
  func.func @transform_2(%arg0: i32) -> (i32, i32) {
    %c0_i32 = arith.constant 0 : i32
    %c0_i32_0 = arith.constant 0 : i32
    %c0_i32_1 = arith.constant 0 : i32
    return %c0_i32, %c0_i32_0 : i32, i32
  }
  func.func @transform_3(%arg0: i32) -> (i32, i32) {
    %c0_i32 = arith.constant 0 : i32
    %c0_i32_0 = arith.constant 0 : i32
    %c0_i32_1 = arith.constant 0 : i32
    return %c0_i32, %c0_i32_0 : i32, i32
  }
  func.func @transform_4(%arg0: i32) -> i32 {
    %c0_i32 = arith.constant 0 : i32
    %c0_i32_0 = arith.constant 0 : i32
    return %c0_i32 : i32
  }
  func.func @transform_5(%arg0: i32) -> (i32, i32, i32) {
    %c0_i32 = arith.constant 0 : i32
    %c0_i32_0 = arith.constant 0 : i32
    %c0_i32_1 = arith.constant 0 : i32
    return %arg0, %c0_i32, %c0_i32_0 : i32, i32, i32
  }
}

</mosaic_0001>

<llo_original>
// kernel: tpu_custom_call.1
$region0: #{tpu_custom_call.1}
  #allocation0 [shape = 'u32[]', space=smem, size = 0x4, offset = 0x4, fixed_abs, tag = 'smem constant byte address 0x4 - core index']
  #allocation1 [shape = 'u32[72,128]{1,0:T(1,128)}', space=vmem, size = 0x9000, scoped, tag = 'internal scratch']
  #allocation2 [shape = 'f32[2,358]{1,0:T(2,128)}', space=vmem, size = 0xc00, scoped, tag = 'scratch operand']
  %s0 = inlined_call_operand.hbm [shape: f32[2,32,256], index: 0, kind: input, shape index: {}]
  %s1 = inlined_call_operand.vmem [shape: f32[2,32], index: 1, kind: input, shape index: {}]
  %s2 = inlined_call_operand.vmem [shape: f32[32,2], index: 2, kind: input, shape index: {}]
  %s3 = inlined_call_operand.vmem [shape: f32[7,256], index: 3, kind: input, shape index: {}]
  %s4 = inlined_call_operand.vmem [shape: f32[98], index: 4, kind: input, shape index: {}]
  %s5 = inlined_call_operand.hbm [shape: f32[2,32,256], index: 5, kind: output, shape index: {}]
  %s6 = sld [smem:[#allocation0]]
  $region61: #{tpu_custom_call.1} parent=0
    _
  %s8 = ssub.s32 1, %s6
  %s9 = scalar_select 0, %s8, %s6
  $region1: #{tpu_custom_call.1} parent=0
    #allocation3 [shape = 'u8[65536]{0}', space=vmem, size = 0x10000, scoped, tag = 'input window, operand 0']
    #allocation4 [shape = 's32[2]{0}', space=sflag, size = 0x8, scoped, tag = 'scoped memory for tpu_custom_call.1']
    #allocation5 [shape = 's32[2]{0}', space=sflag, size = 0x8, scoped, tag = 'scoped memory for tpu_custom_call.1']
    #allocation6 [shape = 's32[2]{0}', space=sflag, size = 0x8, scoped, tag = 'scoped memory for tpu_custom_call.1']
    #allocation7 [shape = 'u8[512]{0}', space=smem, size = 0x200, scoped, tag = 'input window, operand 4, single buffered']
    #allocation8 [shape = 'u8[65536]{0}', space=vmem, size = 0x10000, scoped, tag = 'output window, operand 0']
    %10 = vsyncpa [#allocation4], 0
    %s11 = scalar_lea.sflag [#allocation4], 1
    %12 = vsyncpa %s11, 0
    %13 = vsyncpa [#allocation6], 0
    %14 = vsyncpa [#allocation5], 0
    %s15 = scalar_lea.sflag [#allocation5], 1
    %16 = vsyncpa %s15, 0
    loop: start=0, step=1, limit=4
    $region2: #{tpu_custom_call.1} parent=1 // loop_pre_header
      _
    $region3: #{tpu_custom_call.1} parent=1 // loop_header
      %s18 = sphi 0, %s22
      %p19 = scmp.ge.s32.totalorder %s18, 4
      %s28 = sphi 0, %s30
      %s31 = sphi 0, %s28
      %s32 = sphi 0, %s31
      %s48 = sphi 0, %s32
      %s52 = sphi 0, %s52
      %s54 = sphi 0, %s52
      %s55 = sphi 0, %s54
      %s69 = sphi 0, %s55
      %s73 = sphi 0, %s73
      %s75 = sphi 0, %s73
      %s76 = sphi 0, %s75
      %s90 = sphi 0, %s76
      %s94 = sphi 0, %s94
      %s96 = sphi 0, %s94
      %s97 = sphi 0, %s96
      %s111 = sphi 0, %s97
      %s115 = sphi 0, %s115
      %s117 = sphi 0, %s115
      %s118 = sphi 0, %s117
      %s132 = sphi 0, %s118
      %s138 = sphi 0, %s140
      %s141 = sphi 0, %s138
      %s142 = sphi 0, %s141
      %s158 = sphi 0, %s142
    $region4: #{tpu_custom_call.1} parent=1 // loop_header_branch
      %21 = sbr.rel (%p19) target = $region8
    $region5: #{tpu_custom_call.1} parent=1 // loop_body
      %s23 = ssub.s32 %s18, 1
      %s24 = ssub.s32 %s18, 2
      %s25 = sadd.s32 %s18, 1
      %s26 = ssub.s32 %s18, %s25
      %p27 = scmp.eq.s32.totalorder %s26, 0
      %s29 = sadd.s32 %s28, 1
      %s30 = scalar_select %p27, %s28, %s29
      %p33 = pneg %p27
      %p34 = scmp.eq.s32.totalorder %s18, 1
      %p35 = por %p33, %p34
      %p36 = scmp.ne.s32.totalorder %s28, %s31
      %p37 = scmp.eq.s32.totalorder %s18, 0
      %p38 = por %p36, %p37
      %p39 = scmp.ne.s32.totalorder %s28, %s31
      %p40 = scmp.eq.s32.totalorder %s23, 1
      %p41 = por %p39, %p40
      %p42 = scmp.ne.s32.totalorder %s31, %s32
      %p43 = scmp.eq.s32.totalorder %s23, 0
      %p44 = por %p42, %p43
      %p45 = scmp.ne.s32.totalorder %s31, %s32
      %p46 = scmp.eq.s32.totalorder %s24, 1
      %p47 = por %p45, %p46
      %p49 = scmp.ne.s32.totalorder %s32, %s48
      %p50 = scmp.eq.s32.totalorder %s24, 0
      %p51 = por %p49, %p50
      %s53 = sadd.s32 %s52, 1
      %p56 = scmp.eq.s32.totalorder %s18, 1
      %p57 = scmp.ne.s32.totalorder %s52, %s54
      %p58 = scmp.eq.s32.totalorder %s18, 0
      %p59 = por %p57, %p58
      %p60 = scmp.ne.s32.totalorder %s52, %s54
      %p61 = scmp.eq.s32.totalorder %s23, 1
      %p62 = por %p60, %p61
      %p63 = scmp.ne.s32.totalorder %s54, %s55
      %p64 = scmp.eq.s32.totalorder %s23, 0
      %p65 = por %p63, %p64
      %p66 = scmp.ne.s32.totalorder %s54, %s55
      %p67 = scmp.eq.s32.totalorder %s24, 1
      %p68 = por %p66, %p67
      %p70 = scmp.ne.s32.totalorder %s55, %s69
      %p71 = scmp.eq.s32.totalorder %s24, 0
      %p72 = por %p70, %p71
      %s74 = sadd.s32 %s73, 1
      %p77 = scmp.eq.s32.totalorder %s18, 1
      %p78 = scmp.ne.s32.totalorder %s73, %s75
      %p79 = scmp.eq.s32.totalorder %s18, 0
      %p80 = por %p78, %p79
      %p81 = scmp.ne.s32.totalorder %s73, %s75
      %p82 = scmp.eq.s32.totalorder %s23, 1
      %p83 = por %p81, %p82
      %p84 = scmp.ne.s32.totalorder %s75, %s76
      %p85 = scmp.eq.s32.totalorder %s23, 0
      %p86 = por %p84, %p85
      %p87 = scmp.ne.s32.totalorder %s75, %s76
      %p88 = scmp.eq.s32.totalorder %s24, 1
      %p89 = por %p87, %p88
      %p91 = scmp.ne.s32.totalorder %s76, %s90
      %p92 = scmp.eq.s32.totalorder %s24, 0
      %p93 = por %p91, %p92
      %s95 = sadd.s32 %s94, 1
      %p98 = scmp.eq.s32.totalorder %s18, 1
      %p99 = scmp.ne.s32.totalorder %s94, %s96
      %p100 = scmp.eq.s32.totalorder %s18, 0
      %p101 = por %p99, %p100
      %p102 = scmp.ne.s32.totalorder %s94, %s96
      %p103 = scmp.eq.s32.totalorder %s23, 1
      %p104 = por %p102, %p103
      %p105 = scmp.ne.s32.totalorder %s96, %s97
      %p106 = scmp.eq.s32.totalorder %s23, 0
      %p107 = por %p105, %p106
      %p108 = scmp.ne.s32.totalorder %s96, %s97
      %p109 = scmp.eq.s32.totalorder %s24, 1
      %p110 = por %p108, %p109
      %p112 = scmp.ne.s32.totalorder %s97, %s111
      %p113 = scmp.eq.s32.totalorder %s24, 0
      %p114 = por %p112, %p113
      %s116 = sadd.s32 %s115, 1
      %p119 = scmp.eq.s32.totalorder %s18, 1
      %p120 = scmp.ne.s32.totalorder %s115, %s117
      %p121 = scmp.eq.s32.totalorder %s18, 0
      %p122 = por %p120, %p121
      %p123 = scmp.ne.s32.totalorder %s115, %s117
      %p124 = scmp.eq.s32.totalorder %s23, 1
      %p125 = por %p123, %p124
      %p126 = scmp.ne.s32.totalorder %s117, %s118
      %p127 = scmp.eq.s32.totalorder %s23, 0
      %p128 = por %p126, %p127
      %p129 = scmp.ne.s32.totalorder %s117, %s118
      %p130 = scmp.eq.s32.totalorder %s24, 1
      %p131 = por %p129, %p130
      %p133 = scmp.ne.s32.totalorder %s118, %s132
      %p134 = scmp.eq.s32.totalorder %s24, 0
      %p135 = por %p133, %p134
      %s136 = ssub.s32 %s18, %s25
      %p137 = scmp.eq.s32.totalorder %s136, 0
      %s139 = sadd.s32 %s138, 1
      %s140 = scalar_select %p137, %s138, %s139
      %p143 = pneg %p137
      %p144 = scmp.eq.s32.totalorder %s18, 1
      %p145 = por %p143, %p144
      %p146 = scmp.ne.s32.totalorder %s138, %s141
      %p147 = scmp.eq.s32.totalorder %s18, 0
      %p148 = por %p146, %p147
      %p149 = scmp.ne.s32.totalorder %s138, %s141
      %p150 = scmp.eq.s32.totalorder %s23, 1
      %p151 = por %p149, %p150
      %p152 = scmp.ne.s32.totalorder %s141, %s142
      %p153 = scmp.eq.s32.totalorder %s23, 0
      %p154 = por %p152, %p153
      %p155 = scmp.ne.s32.totalorder %s141, %s142
      %p156 = scmp.eq.s32.totalorder %s24, 1
      %p157 = por %p155, %p156
      %p159 = scmp.ne.s32.totalorder %s142, %s158
      %p160 = scmp.eq.s32.totalorder %s24, 0
      %p161 = por %p159, %p160
      %p162 = scmp.le.s32.totalorder 1, %s18
      %p163 = scmp.lt.s32.totalorder %s18, 3
      %p164 = pnand %p162, %p163
      %p165 = pneg %p164
      // Predicated region
      $region9: #{tpu_custom_call.1} parent=5 // pred_check
        _
      $region10: #{tpu_custom_call.1} parent=5 // pred_check_branch
        %167 = sbr.rel (%p164) target = $region12
      $region11: #{tpu_custom_call.1} parent=5 // pred_region
        %s168 = ssub.s32 %s18, 1
        // Predicated region
        $region13: #{tpu_custom_call.1} parent=11 // pred_check
          %p169 = pneg %p65
        $region14: #{tpu_custom_call.1} parent=11 // pred_check_branch
          %171 = sbr.rel (%p169) target = $region16
        $region15: #{tpu_custom_call.1} parent=11 // pred_region
          _
        $region16: #{tpu_custom_call.1} parent=11 // pred_fallthru
          _
        // Predicated region
        $region17: #{tpu_custom_call.1} parent=11 // pred_check
          %p172 = pneg %p86
        $region18: #{tpu_custom_call.1} parent=11 // pred_check_branch
          %174 = sbr.rel (%p172) target = $region20
        $region19: #{tpu_custom_call.1} parent=11 // pred_region
          _
        $region20: #{tpu_custom_call.1} parent=11 // pred_fallthru
          _
        // Predicated region
        $region21: #{tpu_custom_call.1} parent=11 // pred_check
          %p175 = pneg %p107
        $region22: #{tpu_custom_call.1} parent=11 // pred_check_branch
          %177 = sbr.rel (%p175) target = $region24
        $region23: #{tpu_custom_call.1} parent=11 // pred_region
          _
        $region24: #{tpu_custom_call.1} parent=11 // pred_fallthru
          _
        // Predicated region
        $region25: #{tpu_custom_call.1} parent=11 // pred_check
          %p178 = pneg %p128
        $region26: #{tpu_custom_call.1} parent=11 // pred_check_branch
          %180 = sbr.rel (%p178) target = $region28
        $region27: #{tpu_custom_call.1} parent=11 // pred_region
          %182 = vsyncadd [#allocation6], 0
          %s184 = sshll.u32 %s4, 4
          %s185 = int_to_ptr.vmem [resolvable:$true] %s184
          %187 = dma.vmem_to_smem %s185, 16, [#allocation7], [#allocation6]
        $region28: #{tpu_custom_call.1} parent=11 // pred_fallthru
          _
      $region12: #{tpu_custom_call.1} parent=5 // pred_fallthru
        _
      %p188 = scmp.lt.s32.totalorder %s18, 2
      // Predicated region
      $region29: #{tpu_custom_call.1} parent=5 // pred_check
        %p189 = pneg %p188
      $region30: #{tpu_custom_call.1} parent=5 // pred_check_branch
        %191 = sbr.rel (%p189) target = $region32
      $region31: #{tpu_custom_call.1} parent=5 // pred_region
        // Predicated region
        $region33: #{tpu_custom_call.1} parent=31 // pred_check
          %p192 = pneg %p38
        $region34: #{tpu_custom_call.1} parent=31 // pred_check_branch
          %194 = sbr.rel (%p192) target = $region36
        $region35: #{tpu_custom_call.1} parent=31 // pred_region
          %s195 = sand.u32 %s28, 1
          %s196 = scalar_lea.sflag [#allocation4], %s195
          %s197 = sand.u32 %s28, 1
          %s198 = smul.addr %s197, 64
          %s199 = scalar_lea.vmem [#allocation3], %s198
          %201 = vsyncadd %s196, 0
          %s202 = smul.addr %s18, 8
          %s203 = smul.addr %s202, 8
          %s204 = scalar_lea.hbm %s0, %s203
          %s205 = sshll.u32 %s204, 4
          %s206 = int_to_ptr.hbm [resolvable:$true] %s205
          %s207 = sshll.u32 %s199, 4
          %s208 = int_to_ptr.vmem [resolvable:$true] %s207
          %213 = dma.hbm_to_vmem [thread:$0]  %s206, 1024, %s208, %s196, 256, 256, 16
        $region36: #{tpu_custom_call.1} parent=31 // pred_fallthru
          _
      $region32: #{tpu_custom_call.1} parent=5 // pred_fallthru
        _
      %p214 = scmp.le.s32.totalorder 1, %s18
      %p215 = scmp.lt.s32.totalorder %s18, 3
      %p216 = pnand %p214, %p215
      %p217 = pneg %p216
      // Predicated region
      $region37: #{tpu_custom_call.1} parent=5 // pred_check
        _
      $region38: #{tpu_custom_call.1} parent=5 // pred_check_branch
        %219 = sbr.rel (%p216) target = $region40
      $region39: #{tpu_custom_call.1} parent=5 // pred_region
        %s220 = ssub.s32 %s18, 1
        %s221 = sand.u32 %s31, 1
        %s222 = scalar_lea.sflag [#allocation4], %s221
        %s223 = sand.u32 %s31, 1
        %s224 = smul.addr %s223, 64
        %s225 = scalar_lea.vmem [#allocation3], %s224
        // Predicated region
        $region41: #{tpu_custom_call.1} parent=39 // pred_check
          %p226 = pneg %p44
        $region42: #{tpu_custom_call.1} parent=39 // pred_check_branch
          %228 = sbr.rel (%p226) target = $region44
        $region43: #{tpu_custom_call.1} parent=39 // pred_region
          %230 = dma.done %s222, 1024
        $region44: #{tpu_custom_call.1} parent=39 // pred_fallthru
          _
        // Predicated region
        $region45: #{tpu_custom_call.1} parent=39 // pred_check
          %p231 = pneg %p128
        $region46: #{tpu_custom_call.1} parent=39 // pred_check_branch
          %233 = sbr.rel (%p231) target = $region48
        $region47: #{tpu_custom_call.1} parent=39 // pred_region
          %235 = dma.done [#allocation6], 16
        $region48: #{tpu_custom_call.1} parent=39 // pred_fallthru
          _
        %236 = sfence
        %s237 = sand.u32 %s31, 1
        %s238 = scalar_lea.sflag [#allocation4], %s237
        %s239 = sand.u32 %s31, 1
        %s240 = smul.addr %s239, 64
        %s241 = scalar_lea.vmem [#allocation3], %s240
        %p242 = pneg %p44
        %p243 = pneg %p41
        %p244 = pneg %p65
        %p245 = pneg %p62
        %p246 = pneg %p86
        %p247 = pneg %p83
        %p248 = pneg %p107
        %p249 = pneg %p104
        %p250 = pneg %p128
        %p251 = pneg %p125
        %p252 = pneg %p154
        %p253 = pneg %p151
        %s254 = sand.u32 %s141, 1
        %s255 = scalar_lea.sflag [#allocation5], %s254
        %s256 = sand.u32 %s141, 1
        %s257 = smul.addr %s256, 64
        %s258 = scalar_lea.vmem [#allocation8], %s257
        %v259 = vld [vmem:[%s225] sm:$0xff]
        %v260 = vld [vmem:[%s225 + $0x8] sm:$0xff]
        %v261 = vld [vmem:[%s225 + $0x10] sm:$0xff]
        %v262 = vld [vmem:[%s225 + $0x18] sm:$0xff]
        %v263 = vld [vmem:[%s225 + $0x20] sm:$0xff]
        %v264 = vld [vmem:[%s225 + $0x28] sm:$0xff]
        %v265 = vld [vmem:[%s225 + $0x30] sm:$0xff]
        %v266 = vld [vmem:[%s225 + $0x38] sm:$0xff]
        %v267 = vadd.f32 %v259, %v260
        %268 = vadd.xlane.f32.xlu0 %v267
        %v269 = vpop.xlane.xlu0 %268
        %v270 = vadd.f32 %v261, %v262
        %271 = vadd.xlane.f32.xlu0 %v270
        %v272 = vpop.xlane.xlu0 %271
        %v273 = vadd.f32 %v263, %v264
        %274 = vadd.xlane.f32.xlu0 %v273
        %v275 = vpop.xlane.xlu0 %274
        %v276 = vadd.f32 %v265, %v266
        %277 = vadd.xlane.f32.xlu0 %v276
        %v278 = vpop.xlane.xlu0 %277
        %v279 = vmul.f32 %v269, 0.00390625
        %v280 = vmul.f32 %v272, 0.00390625
        %v281 = vmul.f32 %v275, 0.00390625
        %v282 = vmul.f32 %v278, 0.00390625
        %v283 = vmax.f32 %v259, %v260
        %284 = vmax.xlane.f32.xlu0 %v283
        %v285 = vpop.xlane.xlu0 %284
        %v286 = vmax.f32 %v261, %v262
        %287 = vmax.xlane.f32.xlu0 %v286
        %v288 = vpop.xlane.xlu0 %287
        %v289 = vmax.f32 %v263, %v264
        %290 = vmax.xlane.f32.xlu0 %v289
        %v291 = vpop.xlane.xlu0 %290
        %v292 = vmax.f32 %v265, %v266
        %293 = vmax.xlane.f32.xlu0 %v292
        %v294 = vpop.xlane.xlu0 %293
        %vm295 = vcmask 7168
        %v296 = vsel %vm295, %v279, %v285
        %v297 = vsel %vm295, %v280, %v288
        %v298 = vsel %vm295, %v281, %v291
        %v299 = vsel %vm295, %v282, %v294
        %v300 = vld [vmem:[%s1] sm:$0x3]
        %vm301 = vcmask 261120
        %v303 = vsel %vm301, %v300, 0
        %305 = vmatpush.msra.mxu0 0.0
        %306 = vmatpush.msra.mxu0 0.0
        %307 = vmatpush.msra.mxu0 0.0
        %308 = vmatpush.msra.mxu0 0.0
        %309 = vmatpush.msra.mxu0 0.0
        %310 = vmatpush.msra.mxu0 0.0
        %311 = vmatpush.msra.mxu0 0.0
        %312 = vmatpush.msra.mxu0 0.0
        %313 = vmatpush.msra.mxu0 0.0
        %314 = vmatpush.msra.mxu0 0.0
        %315 = vmatpush.msra.mxu0 0.0
        %316 = vmatpush.msra.mxu0 0.0
        %317 = vmatpush.msra.mxu0 %v299
        %318 = vmatpush.msra.mxu0 %v298
        %319 = vmatpush.msra.mxu0 %v297
        %320 = vmatpush.msra.mxu0 %v296
        %321 = vmatmul.f32.gmra.mxu0 %v303
        %v322 = vpop.f32.mrf.mxu0
        %v323 = vadd.f32 0.0, %v322
        %324 = vdwg.mxu0
        %v325 = vmax.f32 %v323, 0.0
        %v326 = vld [vmem:[%s2] sm:$0xff]
        %v327 = vld [vmem:[%s2 + $0x8] sm:$0xff]
        %v328 = vld [vmem:[%s2 + $0x10] sm:$0xff]
        %v329 = vld [vmem:[%s2 + $0x18] sm:$0xff]
        %vm330 = vcmask 15360
        %v332 = vsel %vm330, %v326, 0
        %v335 = vsel %vm330, %v327, 0
        %v338 = vsel %vm330, %v328, 0
        %v341 = vsel %vm330, %v329, 0
        %vm343 = vcmask 1041408
        %v345 = vsel %vm343, %v325, 0
        %347 = vmatpush.msra.mxu0 0.0
        %348 = vmatpush.msra.mxu0 0.0
        %349 = vmatpush.msra.mxu0 0.0
        %350 = vmatpush.msra.mxu0 0.0
        %351 = vmatpush.msra.mxu0 0.0
        %352 = vmatpush.msra.mxu0 0.0
        %353 = vmatpush.msra.mxu0 0.0
        %354 = vmatpush.msra.mxu0 0.0
        %355 = vmatpush.msra.mxu0 0.0
        %356 = vmatpush.msra.mxu0 0.0
        %357 = vmatpush.msra.mxu0 0.0
        %358 = vmatpush.msra.mxu0 0.0
        %359 = vmatpush.msra.mxu0 0.0
        %360 = vmatpush.msra.mxu0 0.0
        %361 = vmatpush.msra.mxu0 0.0
        %362 = vmatpush.msra.mxu0 %v345
        %363 = vmatmul.f32.gmra.mxu0 %v332
        %v364 = vpop.f32.mrf.mxu0
        %v365 = vadd.f32 0.0, %v364
        %366 = vmatmul.f32.gmra.mxu0 %v335
        %v367 = vpop.f32.mrf.mxu0
        %v368 = vadd.f32 0.0, %v367
        %369 = vmatmul.f32.gmra.mxu0 %v338
        %v370 = vpop.f32.mrf.mxu0
        %v371 = vadd.f32 0.0, %v370
        %372 = vmatmul.f32.gmra.mxu0 %v341
        %v373 = vpop.f32.mrf.mxu0
        %v374 = vadd.f32 0.0, %v373
        %375 = vdwg.mxu0
        %380 = vrot.lane.b32.xlu0 %v365, 127
        %v381 = vpop.permute.xlu0 %380
        %382 = vrot.lane.b32.xlu0 %v368, 127
        %v383 = vpop.permute.xlu0 %382
        %384 = vrot.lane.b32.xlu0 %v371, 127
        %v385 = vpop.permute.xlu0 %384
        %386 = vrot.lane.b32.xlu0 %v374, 127
        %v387 = vpop.permute.xlu0 %386
        %v392 = vadd.f32 %v365, %v381
        %v393 = vadd.f32 %v368, %v383
        %v394 = vadd.f32 %v371, %v385
        %v395 = vadd.f32 %v374, %v387
        %v396 = vxor.u32 %v392, 2147483648
        %v397 = vxor.u32 %v393, 2147483648
        %v398 = vxor.u32 %v394, 2147483648
        %v399 = vxor.u32 %v395, 2147483648
        %v400 = vmul.f32 %v396, 1.442695
        %v401 = vpow.pop %v400
        %v402 = vmul.f32 %v397, 1.442695
        %v403 = vpow.pop %v402
        %v404 = vmul.f32 %v398, 1.442695
        %v405 = vpow.pop %v404
        %v406 = vmul.f32 %v399, 1.442695
        %v407 = vpow.pop %v406
        %v408 = vadd.f32 %v401, 1.0
        %v409 = vadd.f32 %v403, 1.0
        %v410 = vadd.f32 %v405, 1.0
        %v411 = vadd.f32 %v407, 1.0
        %v412 = vrcp.pop %v408
        %v413 = vmul.f32 %v408, %v412
        %v414 = vsub.f32 1.0, %v413
        %v415 = vmul.f32 %v412, %v414
        %v416 = vadd.f32 %v412, %v415
        %vm417 = vweird.f32 %v408
        %vm418 = vweird.f32 %v412
        %vm419 = vmor %vm417, %vm418
        %v420 = vsel %vm419, %v412, %v416
        %v421 = vand.u32 2147483647, %v408
        %vm422 = vcmp.eq.f32.partialorder %v421, 8.507059e+37
        %v423 = vand.u32 %v408, 2147483648
        %v424 = vor.u32 1.1754944e-38, %v423
        %v425 = vsel %vm422, %v424, %v420
        %v426 = vmul.f32 1.0, %v425
        %v427 = vrcp.pop %v409
        %v428 = vmul.f32 %v409, %v427
        %v429 = vsub.f32 1.0, %v428
        %v430 = vmul.f32 %v427, %v429
        %v431 = vadd.f32 %v427, %v430
        %vm432 = vweird.f32 %v409
        %vm433 = vweird.f32 %v427
        %vm434 = vmor %vm432, %vm433
        %v435 = vsel %vm434, %v427, %v431
        %v436 = vand.u32 2147483647, %v409
        %vm437 = vcmp.eq.f32.partialorder %v436, 8.507059e+37
        %v438 = vand.u32 %v409, 2147483648
        %v439 = vor.u32 1.1754944e-38, %v438
        %v440 = vsel %vm437, %v439, %v435
        %v441 = vmul.f32 1.0, %v440
        %v442 = vrcp.pop %v410
        %v443 = vmul.f32 %v410, %v442
        %v444 = vsub.f32 1.0, %v443
        %v445 = vmul.f32 %v442, %v444
        %v446 = vadd.f32 %v442, %v445
        %vm447 = vweird.f32 %v410
        %vm448 = vweird.f32 %v442
        %vm449 = vmor %vm447, %vm448
        %v450 = vsel %vm449, %v442, %v446
        %v451 = vand.u32 2147483647, %v410
        %vm452 = vcmp.eq.f32.partialorder %v451, 8.507059e+37
        %v453 = vand.u32 %v410, 2147483648
        %v454 = vor.u32 1.1754944e-38, %v453
        %v455 = vsel %vm452, %v454, %v450
        %v456 = vmul.f32 1.0, %v455
        %v457 = vrcp.pop %v411
        %v458 = vmul.f32 %v411, %v457
        %v459 = vsub.f32 1.0, %v458
        %v460 = vmul.f32 %v457, %v459
        %v461 = vadd.f32 %v457, %v460
        %vm462 = vweird.f32 %v411
        %vm463 = vweird.f32 %v457
        %vm464 = vmor %vm462, %vm463
        %v465 = vsel %vm464, %v457, %v461
        %v466 = vand.u32 2147483647, %v411
        %vm467 = vcmp.eq.f32.partialorder %v466, 8.507059e+37
        %v468 = vand.u32 %v411, 2147483648
        %v469 = vor.u32 1.1754944e-38, %v468
        %v470 = vsel %vm467, %v469, %v465
        %v471 = vmul.f32 1.0, %v470
        %473 = vset.pattern.permute.xlu0 0
        %474 = vperm.xlu0 %473, %v426
        %v475 = vpop.permute.xlu0 %474
        %478 = vset.pattern.permute.xlu0 0
        %479 = vperm.xlu0 %478, %v441
        %v480 = vpop.permute.xlu0 %479
        %483 = vset.pattern.permute.xlu0 0
        %484 = vperm.xlu0 %483, %v456
        %v485 = vpop.permute.xlu0 %484
        %488 = vset.pattern.permute.xlu0 0
        %489 = vperm.xlu0 %488, %v471
        %v490 = vpop.permute.xlu0 %489
        %v492 = vmul.f32 %v259, %v475
        %v493 = vmul.f32 %v260, %v475
        %v494 = vmul.f32 %v261, %v480
        %v495 = vmul.f32 %v262, %v480
        %v496 = vmul.f32 %v263, %v485
        %v497 = vmul.f32 %v264, %v485
        %v498 = vmul.f32 %v265, %v490
        %v499 = vmul.f32 %v266, %v490
        %v500 = vadd.f32 %v492, %v494
        %v501 = vadd.f32 %v500, %v496
        %v502 = vadd.f32 %v501, %v498
        %v503 = vrot.slane %v502, 4
        %v504 = vadd.f32 %v502, %v503
        %v505 = vrot.slane %v504, 2
        %v506 = vadd.f32 %v504, %v505
        %v507 = vrot.slane %v506, 1
        %v508 = vadd.f32 %v506, %v507
        %v509 = vadd.f32 %v493, %v495
        %v510 = vadd.f32 %v509, %v497
        %v511 = vadd.f32 %v510, %v499
        %v512 = vrot.slane %v511, 4
        %v513 = vadd.f32 %v511, %v512
        %v514 = vrot.slane %v513, 2
        %v515 = vadd.f32 %v513, %v514
        %v516 = vrot.slane %v515, 1
        %v517 = vadd.f32 %v515, %v516
        %v518 = vmul.f32 %v508, 0.03125
        %v519 = vmul.f32 %v517, 0.03125
        %v520 = vmax.f32 %v492, %v496
        %v521 = vmax.f32 %v494, %v498
        %v522 = vmax.f32 %v520, %v521
        %v523 = vrot.slane %v522, 4
        %v524 = vmax.f32 %v522, %v523
        %v525 = vrot.slane %v524, 2
        %v526 = vmax.f32 %v524, %v525
        %v527 = vrot.slane %v526, 1
        %v528 = vmax.f32 %v526, %v527
        %v529 = vmax.f32 %v493, %v497
        %v530 = vmax.f32 %v495, %v499
        %v531 = vmax.f32 %v529, %v530
        %v532 = vrot.slane %v531, 4
        %v533 = vmax.f32 %v531, %v532
        %v534 = vrot.slane %v533, 2
        %v535 = vmax.f32 %v533, %v534
        %v536 = vrot.slane %v535, 1
        %v537 = vmax.f32 %v535, %v536
        %vm538 = vcmask 410624
        %539 = vst.msk [vmem:[#allocation2] sm:$0x3] %vm538, 0.0
        %vm540 = vcmask 828824
        %541 = vst.msk [vmem:[#allocation2 + $0x4] sm:$0x3] %vm540, 0.0
        %v544 = vrot.slane %v519, 7
        %vm545 = vcmask 1040384
        %v546 = vsel %vm545, %v518, %v544
        %547 = vrot.lane.b32.xlu0 %v546, 51
        %v548 = vpop.permute.xlu0 %547
        %v549 = vrot.slane %v548, 7
        %vm550 = vcmask 416768
        %v551 = vsel %vm550, %v549, %v548
        %v553 = vlaneseq
        %vm554 = vcmp.ge.s32.totalorder %v553, 51
        %vm555 = vcmp.lt.s32.totalorder %v553, 307
        %vm556 = vmand %vm554, %vm555
        %557 = vst.msk [vmem:[#allocation2] ss:$2 sm:$0x7] %vm556, %v551
        %v560 = vrot.slane %v537, 7
        %v561 = vsel %vm545, %v528, %v560
        %562 = vrot.lane.b32.xlu0 %v561, 51
        %v563 = vpop.permute.xlu0 %562
        %v564 = vrot.slane %v563, 7
        %v565 = vsel %vm550, %v564, %v563
        %s567 = scalar_lea.vmem [#allocation2], 1
        %568 = vst.msk [vmem:[%s567] ss:$2 sm:$0x7] %vm556, %v565
        %v569 = vld [vmem:[#allocation2] sm:$0x3f]
        %v570 = vld [vmem:[%s3] sm:$0x7f]
        %v571 = vld [vmem:[%s3 + $0x8] sm:$0x7f]
        %s572 = sld [smem:[#allocation7]]
        %s573 = sld [smem:[#allocation7 + $0x31]]
        %v574 = vstv %s572
        %v575 = vmul.f32 %v574, %v569
        %v576 = vadd.f32 %v575, 0.0
        %v577 = vstv %s573
        %v578 = vmul.f32 %v577, %v569
        %v580 = vrot.slane %v578, 7
        %v581 = vrot.slane %v580, 2
        %v583 = vadd.f32 %v576, %v581
        %s584 = sld [smem:[#allocation7 + $0x7]]
        %s585 = sld [smem:[#allocation7 + $0x38]]
        %v586 = vstv %s584
        %v587 = vmul.f32 %v586, %v569
        %589 = vrot.lane.b32.xlu0 %v587, 112
        %v590 = vpop.permute.xlu0 %589
        %v591 = vrot.slane %v590, 2
        %vm592 = vcmask 916480
        %v593 = vsel %vm592, %v590, %v591
        %v595 = vadd.f32 %v583, %v593
        %v596 = vstv %s585
        %v597 = vmul.f32 %v596, %v569
        %v599 = vrot.slane %v597, 7
        %v600 = vrot.slane %v599, 2
        %601 = vrot.lane.b32.xlu0 %v600, 112
        %v602 = vpop.permute.xlu0 %601
        %v603 = vrot.slane %v602, 2
        %v604 = vsel %vm592, %v602, %v603
        %v606 = vadd.f32 %v595, %v604
        %s607 = sld [smem:[#allocation7 + $0xe]]
        %s608 = sld [smem:[#allocation7 + $0x3f]]
        %v609 = vstv %s607
        %v610 = vmul.f32 %v609, %v569
        %612 = vrot.lane.b32.xlu0 %v610, 96
        %v613 = vpop.permute.xlu0 %612
        %v614 = vrot.slane %v613, 2
        %vm615 = vcmask 785408
        %v616 = vsel %vm615, %v613, %v614
        %v618 = vadd.f32 %v606, %v616
        %v619 = vstv %s608
        %v620 = vmul.f32 %v619, %v569
        %v622 = vrot.slane %v620, 7
        %v623 = vrot.slane %v622, 2
        %624 = vrot.lane.b32.xlu0 %v623, 96
        %v625 = vpop.permute.xlu0 %624
        %v626 = vrot.slane %v625, 2
        %v627 = vsel %vm615, %v625, %v626
        %v629 = vadd.f32 %v618, %v627
        %s630 = sld [smem:[#allocation7 + $0x15]]
        %s631 = sld [smem:[#allocation7 + $0x46]]
        %v632 = vstv %s630
        %v633 = vmul.f32 %v632, %v569
        %635 = vrot.lane.b32.xlu0 %v633, 80
        %v636 = vpop.permute.xlu0 %635
        %v637 = vrot.slane %v636, 2
        %vm638 = vcmask 654336
        %v639 = vsel %vm638, %v636, %v637
        %v641 = vadd.f32 %v629, %v639
        %v642 = vstv %s631
        %v643 = vmul.f32 %v642, %v569
        %v645 = vrot.slane %v643, 7
        %v646 = vrot.slane %v645, 2
        %647 = vrot.lane.b32.xlu0 %v646, 80
        %v648 = vpop.permute.xlu0 %647
        %v649 = vrot.slane %v648, 2
        %v650 = vsel %vm638, %v648, %v649
        %v652 = vadd.f32 %v641, %v650
        %s653 = sld [smem:[#allocation7 + $0x1c]]
        %s654 = sld [smem:[#allocation7 + $0x4d]]
        %v655 = vstv %s653
        %v656 = vmul.f32 %v655, %v569
        %658 = vrot.lane.b32.xlu0 %v656, 64
        %v659 = vpop.permute.xlu0 %658
        %v660 = vrot.slane %v659, 2
        %vm661 = vcmask 523264
        %v662 = vsel %vm661, %v659, %v660
        %v664 = vadd.f32 %v652, %v662
        %v665 = vstv %s654
        %v666 = vmul.f32 %v665, %v569
        %v668 = vrot.slane %v666, 7
        %v669 = vrot.slane %v668, 2
        %670 = vrot.lane.b32.xlu0 %v669, 64
        %v671 = vpop.permute.xlu0 %670
        %v672 = vrot.slane %v671, 2
        %v673 = vsel %vm661, %v671, %v672
        %v675 = vadd.f32 %v664, %v673
        %s676 = sld [smem:[#allocation7 + $0x23]]
        %s677 = sld [smem:[#allocation7 + $0x54]]
        %v678 = vstv %s676
        %v679 = vmul.f32 %v678, %v569
        %681 = vrot.lane.b32.xlu0 %v679, 48
        %v682 = vpop.permute.xlu0 %681
        %v683 = vrot.slane %v682, 2
        %vm684 = vcmask 392192
        %v685 = vsel %vm684, %v682, %v683
        %v687 = vadd.f32 %v675, %v685
        %v688 = vstv %s677
        %v689 = vmul.f32 %v688, %v569
        %v691 = vrot.slane %v689, 7
        %v692 = vrot.slane %v691, 2
        %693 = vrot.lane.b32.xlu0 %v692, 48
        %v694 = vpop.permute.xlu0 %693
        %v695 = vrot.slane %v694, 2
        %v696 = vsel %vm684, %v694, %v695
        %v698 = vadd.f32 %v687, %v696
        %s699 = sld [smem:[#allocation7 + $0x2a]]
        %s700 = sld [smem:[#allocation7 + $0x5b]]
        %v701 = vstv %s699
        %v702 = vmul.f32 %v701, %v569
        %704 = vrot.lane.b32.xlu0 %v702, 32
        %v705 = vpop.permute.xlu0 %704
        %v706 = vrot.slane %v705, 2
        %v707 = vsel %vm301, %v705, %v706
        %v709 = vadd.f32 %v698, %v707
        %v710 = vstv %s700
        %v711 = vmul.f32 %v710, %v569
        %v713 = vrot.slane %v711, 7
        %v714 = vrot.slane %v713, 2
        %715 = vrot.lane.b32.xlu0 %v714, 32
        %v716 = vpop.permute.xlu0 %715
        %v717 = vrot.slane %v716, 2
        %v718 = vsel %vm301, %v716, %v717
        %v720 = vadd.f32 %v709, %v718
        %v722 = vperm.slane %v720, 0
        %v723 = vperm.slane %v720, 2
        %v726 = vmul.f32 %v570, %v722
        %v727 = vmul.f32 %v571, %v723
        %v728 = vadd.f32 %v726, 0.0
        %v729 = vadd.f32 %v727, 0.0
        %s730 = sld [smem:[#allocation7 + $0x1]]
        %s731 = sld [smem:[#allocation7 + $0x32]]
        %v732 = vstv %s730
        %v733 = vmul.f32 %v732, %v569
        %v734 = vadd.f32 %v733, 0.0
        %v735 = vstv %s731
        %v736 = vmul.f32 %v735, %v569
        %v738 = vrot.slane %v736, 7
        %v739 = vrot.slane %v738, 2
        %v741 = vadd.f32 %v734, %v739
        %s742 = sld [smem:[#allocation7 + $0x8]]
        %s743 = sld [smem:[#allocation7 + $0x39]]
        %v744 = vstv %s742
        %v745 = vmul.f32 %v744, %v569
        %747 = vrot.lane.b32.xlu0 %v745, 112
        %v748 = vpop.permute.xlu0 %747
        %v749 = vrot.slane %v748, 2
        %v750 = vsel %vm592, %v748, %v749
        %v752 = vadd.f32 %v741, %v750
        %v753 = vstv %s743
        %v754 = vmul.f32 %v753, %v569
        %v756 = vrot.slane %v754, 7
        %v757 = vrot.slane %v756, 2
        %758 = vrot.lane.b32.xlu0 %v757, 112
        %v759 = vpop.permute.xlu0 %758
        %v760 = vrot.slane %v759, 2
        %v761 = vsel %vm592, %v759, %v760
        %v763 = vadd.f32 %v752, %v761
        %s764 = sld [smem:[#allocation7 + $0xf]]
        %s765 = sld [smem:[#allocation7 + $0x40]]
        %v766 = vstv %s764
        %v767 = vmul.f32 %v766, %v569
        %769 = vrot.lane.b32.xlu0 %v767, 96
        %v770 = vpop.permute.xlu0 %769
        %v771 = vrot.slane %v770, 2
        %v772 = vsel %vm615, %v770, %v771
        %v774 = vadd.f32 %v763, %v772
        %v775 = vstv %s765
        %v776 = vmul.f32 %v775, %v569
        %v778 = vrot.slane %v776, 7
        %v779 = vrot.slane %v778, 2
        %780 = vrot.lane.b32.xlu0 %v779, 96
        %v781 = vpop.permute.xlu0 %780
        %v782 = vrot.slane %v781, 2
        %v783 = vsel %vm615, %v781, %v782
        %v785 = vadd.f32 %v774, %v783
        %s786 = sld [smem:[#allocation7 + $0x16]]
        %s787 = sld [smem:[#allocation7 + $0x47]]
        %v788 = vstv %s786
        %v789 = vmul.f32 %v788, %v569
        %791 = vrot.lane.b32.xlu0 %v789, 80
        %v792 = vpop.permute.xlu0 %791
        %v793 = vrot.slane %v792, 2
        %v794 = vsel %vm638, %v792, %v793
        %v796 = vadd.f32 %v785, %v794
        %v797 = vstv %s787
        %v798 = vmul.f32 %v797, %v569
        %v800 = vrot.slane %v798, 7
        %v801 = vrot.slane %v800, 2
        %802 = vrot.lane.b32.xlu0 %v801, 80
        %v803 = vpop.permute.xlu0 %802
        %v804 = vrot.slane %v803, 2
        %v805 = vsel %vm638, %v803, %v804
        %v807 = vadd.f32 %v796, %v805
        %s808 = sld [smem:[#allocation7 + $0x1d]]
        %s809 = sld [smem:[#allocation7 + $0x4e]]
        %v810 = vstv %s808
        %v811 = vmul.f32 %v810, %v569
        %813 = vrot.lane.b32.xlu0 %v811, 64
        %v814 = vpop.permute.xlu0 %813
        %v815 = vrot.slane %v814, 2
        %v816 = vsel %vm661, %v814, %v815
        %v818 = vadd.f32 %v807, %v816
        %v819 = vstv %s809
        %v820 = vmul.f32 %v819, %v569
        %v822 = vrot.slane %v820, 7
        %v823 = vrot.slane %v822, 2
        %824 = vrot.lane.b32.xlu0 %v823, 64
        %v825 = vpop.permute.xlu0 %824
        %v826 = vrot.slane %v825, 2
        %v827 = vsel %vm661, %v825, %v826
        %v829 = vadd.f32 %v818, %v827
        %s830 = sld [smem:[#allocation7 + $0x24]]
        %s831 = sld [smem:[#allocation7 + $0x55]]
        %v832 = vstv %s830
        %v833 = vmul.f32 %v832, %v569
        %835 = vrot.lane.b32.xlu0 %v833, 48
        %v836 = vpop.permute.xlu0 %835
        %v837 = vrot.slane %v836, 2
        %v838 = vsel %vm684, %v836, %v837
        %v840 = vadd.f32 %v829, %v838
        %v841 = vstv %s831
        %v842 = vmul.f32 %v841, %v569
        %v844 = vrot.slane %v842, 7
        %v845 = vrot.slane %v844, 2
        %846 = vrot.lane.b32.xlu0 %v845, 48
        %v847 = vpop.permute.xlu0 %846
        %v848 = vrot.slane %v847, 2
        %v849 = vsel %vm684, %v847, %v848
        %v851 = vadd.f32 %v840, %v849
        %s852 = sld [smem:[#allocation7 + $0x2b]]
        %s853 = sld [smem:[#allocation7 + $0x5c]]
        %v854 = vstv %s852
        %v855 = vmul.f32 %v854, %v569
        %857 = vrot.lane.b32.xlu0 %v855, 32
        %v858 = vpop.permute.xlu0 %857
        %v859 = vrot.slane %v858, 2
        %v860 = vsel %vm301, %v858, %v859
        %v862 = vadd.f32 %v851, %v860
        %v863 = vstv %s853
        %v864 = vmul.f32 %v863, %v569
        %v866 = vrot.slane %v864, 7
        %v867 = vrot.slane %v866, 2
        %868 = vrot.lane.b32.xlu0 %v867, 32
        %v869 = vpop.permute.xlu0 %868
        %v870 = vrot.slane %v869, 2
        %v871 = vsel %vm301, %v869, %v870
        %v873 = vadd.f32 %v862, %v871
        %v875 = vperm.slane %v873, 0
        %v876 = vperm.slane %v873, 2
        %v877 = vperm.slane %v873, 4
        %878 = vrot.lane.b32.xlu0 %v875, 127
        %v879 = vpop.permute.xlu0 %878
        %880 = vrot.lane.b32.xlu0 %v876, 127
        %v881 = vpop.permute.xlu0 %880
        %882 = vrot.lane.b32.xlu0 %v877, 127
        %v883 = vpop.permute.xlu0 %882
        %vm884 = vcmask 1039360
        %v885 = vsel %vm884, %v879, %v881
        %v886 = vsel %vm884, %v881, %v883
        %v889 = vmul.f32 %v570, %v885
        %v890 = vmul.f32 %v571, %v886
        %v893 = vrot.slane %v889, 1
        %v894 = vrot.slane %v890, 1
        %v897 = vadd.f32 %v728, %v893
        %v898 = vadd.f32 %v729, %v894
        %s899 = sld [smem:[#allocation7 + $0x2]]
        %s900 = sld [smem:[#allocation7 + $0x33]]
        %v901 = vstv %s899
        %v902 = vmul.f32 %v901, %v569
        %v903 = vadd.f32 %v902, 0.0
        %v904 = vstv %s900
        %v905 = vmul.f32 %v904, %v569
        %v907 = vrot.slane %v905, 7
        %v908 = vrot.slane %v907, 2
        %v910 = vadd.f32 %v903, %v908
        %s911 = sld [smem:[#allocation7 + $0x9]]
        %s912 = sld [smem:[#allocation7 + $0x3a]]
        %v913 = vstv %s911
        %v914 = vmul.f32 %v913, %v569
        %916 = vrot.lane.b32.xlu0 %v914, 112
        %v917 = vpop.permute.xlu0 %916
        %v918 = vrot.slane %v917, 2
        %v919 = vsel %vm592, %v917, %v918
        %v921 = vadd.f32 %v910, %v919
        %v922 = vstv %s912
        %v923 = vmul.f32 %v922, %v569
        %v925 = vrot.slane %v923, 7
        %v926 = vrot.slane %v925, 2
        %927 = vrot.lane.b32.xlu0 %v926, 112
        %v928 = vpop.permute.xlu0 %927
        %v929 = vrot.slane %v928, 2
        %v930 = vsel %vm592, %v928, %v929
        %v932 = vadd.f32 %v921, %v930
        %s933 = sld [smem:[#allocation7 + $0x10]]
        %s934 = sld [smem:[#allocation7 + $0x41]]
        %v935 = vstv %s933
        %v936 = vmul.f32 %v935, %v569
        %938 = vrot.lane.b32.xlu0 %v936, 96
        %v939 = vpop.permute.xlu0 %938
        %v940 = vrot.slane %v939, 2
        %v941 = vsel %vm615, %v939, %v940
        %v943 = vadd.f32 %v932, %v941
        %v944 = vstv %s934
        %v945 = vmul.f32 %v944, %v569
        %v947 = vrot.slane %v945, 7
        %v948 = vrot.slane %v947, 2
        %949 = vrot.lane.b32.xlu0 %v948, 96
        %v950 = vpop.permute.xlu0 %949
        %v951 = vrot.slane %v950, 2
        %v952 = vsel %vm615, %v950, %v951
        %v954 = vadd.f32 %v943, %v952
        %s955 = sld [smem:[#allocation7 + $0x17]]
        %s956 = sld [smem:[#allocation7 + $0x48]]
        %v957 = vstv %s955
        %v958 = vmul.f32 %v957, %v569
        %960 = vrot.lane.b32.xlu0 %v958, 80
        %v961 = vpop.permute.xlu0 %960
        %v962 = vrot.slane %v961, 2
        %v963 = vsel %vm638, %v961, %v962
        %v965 = vadd.f32 %v954, %v963
        %v966 = vstv %s956
        %v967 = vmul.f32 %v966, %v569
        %v969 = vrot.slane %v967, 7
        %v970 = vrot.slane %v969, 2
        %971 = vrot.lane.b32.xlu0 %v970, 80
        %v972 = vpop.permute.xlu0 %971
        %v973 = vrot.slane %v972, 2
        %v974 = vsel %vm638, %v972, %v973
        %v976 = vadd.f32 %v965, %v974
        %s977 = sld [smem:[#allocation7 + $0x1e]]
        %s978 = sld [smem:[#allocation7 + $0x4f]]
        %v979 = vstv %s977
        %v980 = vmul.f32 %v979, %v569
        %982 = vrot.lane.b32.xlu0 %v980, 64
        %v983 = vpop.permute.xlu0 %982
        %v984 = vrot.slane %v983, 2
        %v985 = vsel %vm661, %v983, %v984
        %v987 = vadd.f32 %v976, %v985
        %v988 = vstv %s978
        %v989 = vmul.f32 %v988, %v569
        %v991 = vrot.slane %v989, 7
        %v992 = vrot.slane %v991, 2
        %993 = vrot.lane.b32.xlu0 %v992, 64
        %v994 = vpop.permute.xlu0 %993
        %v995 = vrot.slane %v994, 2
        %v996 = vsel %vm661, %v994, %v995
        %v998 = vadd.f32 %v987, %v996
        %s999 = sld [smem:[#allocation7 + $0x25]]
        %s1000 = sld [smem:[#allocation7 + $0x56]]
        %v1001 = vstv %s999
        %v1002 = vmul.f32 %v1001, %v569
        %1004 = vrot.lane.b32.xlu0 %v1002, 48
        %v1005 = vpop.permute.xlu0 %1004
        %v1006 = vrot.slane %v1005, 2
        %v1007 = vsel %vm684, %v1005, %v1006
        %v1009 = vadd.f32 %v998, %v1007
        %v1010 = vstv %s1000
        %v1011 = vmul.f32 %v1010, %v569
        %v1013 = vrot.slane %v1011, 7
        %v1014 = vrot.slane %v1013, 2
        %1015 = vrot.lane.b32.xlu0 %v1014, 48
        %v1016 = vpop.permute.xlu0 %1015
        %v1017 = vrot.slane %v1016, 2
        %v1018 = vsel %vm684, %v1016, %v1017
        %v1020 = vadd.f32 %v1009, %v1018
        %s1021 = sld [smem:[#allocation7 + $0x2c]]
        %s1022 = sld [smem:[#allocation7 + $0x5d]]
        %v1023 = vstv %s1021
        %v1024 = vmul.f32 %v1023, %v569
        %1026 = vrot.lane.b32.xlu0 %v1024, 32
        %v1027 = vpop.permute.xlu0 %1026
        %v1028 = vrot.slane %v1027, 2
        %v1029 = vsel %vm301, %v1027, %v1028
        %v1031 = vadd.f32 %v1020, %v1029
        %v1032 = vstv %s1022
        %v1033 = vmul.f32 %v1032, %v569
        %v1035 = vrot.slane %v1033, 7
        %v1036 = vrot.slane %v1035, 2
        %1037 = vrot.lane.b32.xlu0 %v1036, 32
        %v1038 = vpop.permute.xlu0 %1037
        %v1039 = vrot.slane %v1038, 2
        %v1040 = vsel %vm301, %v1038, %v1039
        %v1042 = vadd.f32 %v1031, %v1040
        %v1044 = vperm.slane %v1042, 0
        %v1045 = vperm.slane %v1042, 2
        %v1046 = vperm.slane %v1042, 4
        %1047 = vrot.lane.b32.xlu0 %v1044, 126
        %v1048 = vpop.permute.xlu0 %1047
        %1049 = vrot.lane.b32.xlu0 %v1045, 126
        %v1050 = vpop.permute.xlu0 %1049
        %1051 = vrot.lane.b32.xlu0 %v1046, 126
        %v1052 = vpop.permute.xlu0 %1051
        %vm1053 = vcmask 1031168
        %v1054 = vsel %vm1053, %v1048, %v1050
        %v1055 = vsel %vm1053, %v1050, %v1052
        %v1058 = vmul.f32 %v570, %v1054
        %v1059 = vmul.f32 %v571, %v1055
        %v1062 = vrot.slane %v1058, 2
        %v1063 = vrot.slane %v1059, 2
        %v1066 = vadd.f32 %v897, %v1062
        %v1067 = vadd.f32 %v898, %v1063
        %s1068 = sld [smem:[#allocation7 + $0x3]]
        %s1069 = sld [smem:[#allocation7 + $0x34]]
        %v1070 = vstv %s1068
        %v1071 = vmul.f32 %v1070, %v569
        %v1072 = vadd.f32 %v1071, 0.0
        %v1073 = vstv %s1069
        %v1074 = vmul.f32 %v1073, %v569
        %v1076 = vrot.slane %v1074, 7
        %v1077 = vrot.slane %v1076, 2
        %v1079 = vadd.f32 %v1072, %v1077
        %s1080 = sld [smem:[#allocation7 + $0xa]]
        %s1081 = sld [smem:[#allocation7 + $0x3b]]
        %v1082 = vstv %s1080
        %v1083 = vmul.f32 %v1082, %v569
        %1085 = vrot.lane.b32.xlu0 %v1083, 112
        %v1086 = vpop.permute.xlu0 %1085
        %v1087 = vrot.slane %v1086, 2
        %v1088 = vsel %vm592, %v1086, %v1087
        %v1090 = vadd.f32 %v1079, %v1088
        %v1091 = vstv %s1081
        %v1092 = vmul.f32 %v1091, %v569
        %v1094 = vrot.slane %v1092, 7
        %v1095 = vrot.slane %v1094, 2
        %1096 = vrot.lane.b32.xlu0 %v1095, 112
        %v1097 = vpop.permute.xlu0 %1096
        %v1098 = vrot.slane %v1097, 2
        %v1099 = vsel %vm592, %v1097, %v1098
        %v1101 = vadd.f32 %v1090, %v1099
        %s1102 = sld [smem:[#allocation7 + $0x11]]
        %s1103 = sld [smem:[#allocation7 + $0x42]]
        %v1104 = vstv %s1102
        %v1105 = vmul.f32 %v1104, %v569
        %1107 = vrot.lane.b32.xlu0 %v1105, 96
        %v1108 = vpop.permute.xlu0 %1107
        %v1109 = vrot.slane %v1108, 2
        %v1110 = vsel %vm615, %v1108, %v1109
        %v1112 = vadd.f32 %v1101, %v1110
        %v1113 = vstv %s1103
        %v1114 = vmul.f32 %v1113, %v569
        %v1116 = vrot.slane %v1114, 7
        %v1117 = vrot.slane %v1116, 2
        %1118 = vrot.lane.b32.xlu0 %v1117, 96
        %v1119 = vpop.permute.xlu0 %1118
        %v1120 = vrot.slane %v1119, 2
        %v1121 = vsel %vm615, %v1119, %v1120
        %v1123 = vadd.f32 %v1112, %v1121
        %s1124 = sld [smem:[#allocation7 + $0x18]]
        %s1125 = sld [smem:[#allocation7 + $0x49]]
        %v1126 = vstv %s1124
        %v1127 = vmul.f32 %v1126, %v569
        %1129 = vrot.lane.b32.xlu0 %v1127, 80
        %v1130 = vpop.permute.xlu0 %1129
        %v1131 = vrot.slane %v1130, 2
        %v1132 = vsel %vm638, %v1130, %v1131
        %v1134 = vadd.f32 %v1123, %v1132
        %v1135 = vstv %s1125
        %v1136 = vmul.f32 %v1135, %v569
        %v1138 = vrot.slane %v1136, 7
        %v1139 = vrot.slane %v1138, 2
        %1140 = vrot.lane.b32.xlu0 %v1139, 80
        %v1141 = vpop.permute.xlu0 %1140
        %v1142 = vrot.slane %v1141, 2
        %v1143 = vsel %vm638, %v1141, %v1142
        %v1145 = vadd.f32 %v1134, %v1143
        %s1146 = sld [smem:[#allocation7 + $0x1f]]
        %s1147 = sld [smem:[#allocation7 + $0x50]]
        %v1148 = vstv %s1146
        %v1149 = vmul.f32 %v1148, %v569
        %1151 = vrot.lane.b32.xlu0 %v1149, 64
        %v1152 = vpop.permute.xlu0 %1151
        %v1153 = vrot.slane %v1152, 2
        %v1154 = vsel %vm661, %v1152, %v1153
        %v1156 = vadd.f32 %v1145, %v1154
        %v1157 = vstv %s1147
        %v1158 = vmul.f32 %v1157, %v569
        %v1160 = vrot.slane %v1158, 7
        %v1161 = vrot.slane %v1160, 2
        %1162 = vrot.lane.b32.xlu0 %v1161, 64
        %v1163 = vpop.permute.xlu0 %1162
        %v1164 = vrot.slane %v1163, 2
        %v1165 = vsel %vm661, %v1163, %v1164
        %v1167 = vadd.f32 %v1156, %v1165
        %s1168 = sld [smem:[#allocation7 + $0x26]]
        %s1169 = sld [smem:[#allocation7 + $0x57]]
        %v1170 = vstv %s1168
        %v1171 = vmul.f32 %v1170, %v569
        %1173 = vrot.lane.b32.xlu0 %v1171, 48
        %v1174 = vpop.permute.xlu0 %1173
        %v1175 = vrot.slane %v1174, 2
        %v1176 = vsel %vm684, %v1174, %v1175
        %v1178 = vadd.f32 %v1167, %v1176
        %v1179 = vstv %s1169
        %v1180 = vmul.f32 %v1179, %v569
        %v1182 = vrot.slane %v1180, 7
        %v1183 = vrot.slane %v1182, 2
        %1184 = vrot.lane.b32.xlu0 %v1183, 48
        %v1185 = vpop.permute.xlu0 %1184
        %v1186 = vrot.slane %v1185, 2
        %v1187 = vsel %vm684, %v1185, %v1186
        %v1189 = vadd.f32 %v1178, %v1187
        %s1190 = sld [smem:[#allocation7 + $0x2d]]
        %s1191 = sld [smem:[#allocation7 + $0x5e]]
        %v1192 = vstv %s1190
        %v1193 = vmul.f32 %v1192, %v569
        %1195 = vrot.lane.b32.xlu0 %v1193, 32
        %v1196 = vpop.permute.xlu0 %1195
        %v1197 = vrot.slane %v1196, 2
        %v1198 = vsel %vm301, %v1196, %v1197
        %v1200 = vadd.f32 %v1189, %v1198
        %v1201 = vstv %s1191
        %v1202 = vmul.f32 %v1201, %v569
        %v1204 = vrot.slane %v1202, 7
        %v1205 = vrot.slane %v1204, 2
        %1206 = vrot.lane.b32.xlu0 %v1205, 32
        %v1207 = vpop.permute.xlu0 %1206
        %v1208 = vrot.slane %v1207, 2
        %v1209 = vsel %vm301, %v1207, %v1208
        %v1211 = vadd.f32 %v1200, %v1209
        %v1213 = vperm.slane %v1211, 0
        %v1214 = vperm.slane %v1211, 2
        %v1215 = vperm.slane %v1211, 4
        %1216 = vrot.lane.b32.xlu0 %v1213, 125
        %v1217 = vpop.permute.xlu0 %1216
        %1218 = vrot.lane.b32.xlu0 %v1214, 125
        %v1219 = vpop.permute.xlu0 %1218
        %1220 = vrot.lane.b32.xlu0 %v1215, 125
        %v1221 = vpop.permute.xlu0 %1220
        %vm1222 = vcmask 1022976
        %v1223 = vsel %vm1222, %v1217, %v1219
        %v1224 = vsel %vm1222, %v1219, %v1221
        %v1227 = vmul.f32 %v570, %v1223
        %v1228 = vmul.f32 %v571, %v1224
        %v1231 = vrot.slane %v1227, 3
        %v1232 = vrot.slane %v1228, 3
        %v1235 = vadd.f32 %v1066, %v1231
        %v1236 = vadd.f32 %v1067, %v1232
        %s1237 = sld [smem:[#allocation7 + $0x4]]
        %s1238 = sld [smem:[#allocation7 + $0x35]]
        %v1239 = vstv %s1237
        %v1240 = vmul.f32 %v1239, %v569
        %v1241 = vadd.f32 %v1240, 0.0
        %v1242 = vstv %s1238
        %v1243 = vmul.f32 %v1242, %v569
        %v1245 = vrot.slane %v1243, 7
        %v1246 = vrot.slane %v1245, 2
        %v1248 = vadd.f32 %v1241, %v1246
        %s1249 = sld [smem:[#allocation7 + $0xb]]
        %s1250 = sld [smem:[#allocation7 + $0x3c]]
        %v1251 = vstv %s1249
        %v1252 = vmul.f32 %v1251, %v569
        %1254 = vrot.lane.b32.xlu0 %v1252, 112
        %v1255 = vpop.permute.xlu0 %1254
        %v1256 = vrot.slane %v1255, 2
        %v1257 = vsel %vm592, %v1255, %v1256
        %v1259 = vadd.f32 %v1248, %v1257
        %v1260 = vstv %s1250
        %v1261 = vmul.f32 %v1260, %v569
        %v1263 = vrot.slane %v1261, 7
        %v1264 = vrot.slane %v1263, 2
        %1265 = vrot.lane.b32.xlu0 %v1264, 112
        %v1266 = vpop.permute.xlu0 %1265
        %v1267 = vrot.slane %v1266, 2
        %v1268 = vsel %vm592, %v1266, %v1267
        %v1270 = vadd.f32 %v1259, %v1268
        %s1271 = sld [smem:[#allocation7 + $0x12]]
        %s1272 = sld [smem:[#allocation7 + $0x43]]
        %v1273 = vstv %s1271
        %v1274 = vmul.f32 %v1273, %v569
        %1276 = vrot.lane.b32.xlu0 %v1274, 96
        %v1277 = vpop.permute.xlu0 %1276
        %v1278 = vrot.slane %v1277, 2
        %v1279 = vsel %vm615, %v1277, %v1278
        %v1281 = vadd.f32 %v1270, %v1279
        %v1282 = vstv %s1272
        %v1283 = vmul.f32 %v1282, %v569
        %v1285 = vrot.slane %v1283, 7
        %v1286 = vrot.slane %v1285, 2
        %1287 = vrot.lane.b32.xlu0 %v1286, 96
        %v1288 = vpop.permute.xlu0 %1287
        %v1289 = vrot.slane %v1288, 2
        %v1290 = vsel %vm615, %v1288, %v1289
        %v1292 = vadd.f32 %v1281, %v1290
        %s1293 = sld [smem:[#allocation7 + $0x19]]
        %s1294 = sld [smem:[#allocation7 + $0x4a]]
        %v1295 = vstv %s1293
        %v1296 = vmul.f32 %v1295, %v569
        %1298 = vrot.lane.b32.xlu0 %v1296, 80
        %v1299 = vpop.permute.xlu0 %1298
        %v1300 = vrot.slane %v1299, 2
        %v1301 = vsel %vm638, %v1299, %v1300
        %v1303 = vadd.f32 %v1292, %v1301
        %v1304 = vstv %s1294
        %v1305 = vmul.f32 %v1304, %v569
        %v1307 = vrot.slane %v1305, 7
        %v1308 = vrot.slane %v1307, 2
        %1309 = vrot.lane.b32.xlu0 %v1308, 80
        %v1310 = vpop.permute.xlu0 %1309
        %v1311 = vrot.slane %v1310, 2
        %v1312 = vsel %vm638, %v1310, %v1311
        %v1314 = vadd.f32 %v1303, %v1312
        %s1315 = sld [smem:[#allocation7 + $0x20]]
        %s1316 = sld [smem:[#allocation7 + $0x51]]
        %v1317 = vstv %s1315
        %v1318 = vmul.f32 %v1317, %v569
        %1320 = vrot.lane.b32.xlu0 %v1318, 64
        %v1321 = vpop.permute.xlu0 %1320
        %v1322 = vrot.slane %v1321, 2
        %v1323 = vsel %vm661, %v1321, %v1322
        %v1325 = vadd.f32 %v1314, %v1323
        %v1326 = vstv %s1316
        %v1327 = vmul.f32 %v1326, %v569
        %v1329 = vrot.slane %v1327, 7
        %v1330 = vrot.slane %v1329, 2
        %1331 = vrot.lane.b32.xlu0 %v1330, 64
        %v1332 = vpop.permute.xlu0 %1331
        %v1333 = vrot.slane %v1332, 2
        %v1334 = vsel %vm661, %v1332, %v1333
        %v1336 = vadd.f32 %v1325, %v1334
        %s1337 = sld [smem:[#allocation7 + $0x27]]
        %s1338 = sld [smem:[#allocation7 + $0x58]]
        %v1339 = vstv %s1337
        %v1340 = vmul.f32 %v1339, %v569
        %1342 = vrot.lane.b32.xlu0 %v1340, 48
        %v1343 = vpop.permute.xlu0 %1342
        %v1344 = vrot.slane %v1343, 2
        %v1345 = vsel %vm684, %v1343, %v1344
        %v1347 = vadd.f32 %v1336, %v1345
        %v1348 = vstv %s1338
        %v1349 = vmul.f32 %v1348, %v569
        %v1351 = vrot.slane %v1349, 7
        %v1352 = vrot.slane %v1351, 2
        %1353 = vrot.lane.b32.xlu0 %v1352, 48
        %v1354 = vpop.permute.xlu0 %1353
        %v1355 = vrot.slane %v1354, 2
        %v1356 = vsel %vm684, %v1354, %v1355
        %v1358 = vadd.f32 %v1347, %v1356
        %s1359 = sld [smem:[#allocation7 + $0x2e]]
        %s1360 = sld [smem:[#allocation7 + $0x5f]]
        %v1361 = vstv %s1359
        %v1362 = vmul.f32 %v1361, %v569
        %1364 = vrot.lane.b32.xlu0 %v1362, 32
        %v1365 = vpop.permute.xlu0 %1364
        %v1366 = vrot.slane %v1365, 2
        %v1367 = vsel %vm301, %v1365, %v1366
        %v1369 = vadd.f32 %v1358, %v1367
        %v1370 = vstv %s1360
        %v1371 = vmul.f32 %v1370, %v569
        %v1373 = vrot.slane %v1371, 7
        %v1374 = vrot.slane %v1373, 2
        %1375 = vrot.lane.b32.xlu0 %v1374, 32
        %v1376 = vpop.permute.xlu0 %1375
        %v1377 = vrot.slane %v1376, 2
        %v1378 = vsel %vm301, %v1376, %v1377
        %v1380 = vadd.f32 %v1369, %v1378
        %v1382 = vperm.slane %v1380, 0
        %v1383 = vperm.slane %v1380, 2
        %v1384 = vperm.slane %v1380, 4
        %1385 = vrot.lane.b32.xlu0 %v1382, 124
        %v1386 = vpop.permute.xlu0 %1385
        %1387 = vrot.lane.b32.xlu0 %v1383, 124
        %v1388 = vpop.permute.xlu0 %1387
        %1389 = vrot.lane.b32.xlu0 %v1384, 124
        %v1390 = vpop.permute.xlu0 %1389
        %vm1391 = vcmask 1014784
        %v1392 = vsel %vm1391, %v1386, %v1388
        %v1393 = vsel %vm1391, %v1388, %v1390
        %v1396 = vmul.f32 %v570, %v1392
        %v1397 = vmul.f32 %v571, %v1393
        %v1400 = vrot.slane %v1396, 4
        %v1401 = vrot.slane %v1397, 4
        %v1404 = vadd.f32 %v1235, %v1400
        %v1405 = vadd.f32 %v1236, %v1401
        %s1406 = sld [smem:[#allocation7 + $0x5]]
        %s1407 = sld [smem:[#allocation7 + $0x36]]
        %v1408 = vstv %s1406
        %v1409 = vmul.f32 %v1408, %v569
        %v1410 = vadd.f32 %v1409, 0.0
        %v1411 = vstv %s1407
        %v1412 = vmul.f32 %v1411, %v569
        %v1414 = vrot.slane %v1412, 7
        %v1415 = vrot.slane %v1414, 2
        %v1417 = vadd.f32 %v1410, %v1415
        %s1418 = sld [smem:[#allocation7 + $0xc]]
        %s1419 = sld [smem:[#allocation7 + $0x3d]]
        %v1420 = vstv %s1418
        %v1421 = vmul.f32 %v1420, %v569
        %1423 = vrot.lane.b32.xlu0 %v1421, 112
        %v1424 = vpop.permute.xlu0 %1423
        %v1425 = vrot.slane %v1424, 2
        %v1426 = vsel %vm592, %v1424, %v1425
        %v1428 = vadd.f32 %v1417, %v1426
        %v1429 = vstv %s1419
        %v1430 = vmul.f32 %v1429, %v569
        %v1432 = vrot.slane %v1430, 7
        %v1433 = vrot.slane %v1432, 2
        %1434 = vrot.lane.b32.xlu0 %v1433, 112
        %v1435 = vpop.permute.xlu0 %1434
        %v1436 = vrot.slane %v1435, 2
        %v1437 = vsel %vm592, %v1435, %v1436
        %v1439 = vadd.f32 %v1428, %v1437
        %s1440 = sld [smem:[#allocation7 + $0x13]]
        %s1441 = sld [smem:[#allocation7 + $0x44]]
        %v1442 = vstv %s1440
        %v1443 = vmul.f32 %v1442, %v569
        %1445 = vrot.lane.b32.xlu0 %v1443, 96
        %v1446 = vpop.permute.xlu0 %1445
        %v1447 = vrot.slane %v1446, 2
        %v1448 = vsel %vm615, %v1446, %v1447
        %v1450 = vadd.f32 %v1439, %v1448
        %v1451 = vstv %s1441
        %v1452 = vmul.f32 %v1451, %v569
        %v1454 = vrot.slane %v1452, 7
        %v1455 = vrot.slane %v1454, 2
        %1456 = vrot.lane.b32.xlu0 %v1455, 96
        %v1457 = vpop.permute.xlu0 %1456
        %v1458 = vrot.slane %v1457, 2
        %v1459 = vsel %vm615, %v1457, %v1458
        %v1461 = vadd.f32 %v1450, %v1459
        %s1462 = sld [smem:[#allocation7 + $0x1a]]
        %s1463 = sld [smem:[#allocation7 + $0x4b]]
        %v1464 = vstv %s1462
        %v1465 = vmul.f32 %v1464, %v569
        %1467 = vrot.lane.b32.xlu0 %v1465, 80
        %v1468 = vpop.permute.xlu0 %1467
        %v1469 = vrot.slane %v1468, 2
        %v1470 = vsel %vm638, %v1468, %v1469
        %v1472 = vadd.f32 %v1461, %v1470
        %v1473 = vstv %s1463
        %v1474 = vmul.f32 %v1473, %v569
        %v1476 = vrot.slane %v1474, 7
        %v1477 = vrot.slane %v1476, 2
        %1478 = vrot.lane.b32.xlu0 %v1477, 80
        %v1479 = vpop.permute.xlu0 %1478
        %v1480 = vrot.slane %v1479, 2
        %v1481 = vsel %vm638, %v1479, %v1480
        %v1483 = vadd.f32 %v1472, %v1481
        %s1484 = sld [smem:[#allocation7 + $0x21]]
        %s1485 = sld [smem:[#allocation7 + $0x52]]
        %v1486 = vstv %s1484
        %v1487 = vmul.f32 %v1486, %v569
        %1489 = vrot.lane.b32.xlu0 %v1487, 64
        %v1490 = vpop.permute.xlu0 %1489
        %v1491 = vrot.slane %v1490, 2
        %v1492 = vsel %vm661, %v1490, %v1491
        %v1494 = vadd.f32 %v1483, %v1492
        %v1495 = vstv %s1485
        %v1496 = vmul.f32 %v1495, %v569
        %v1498 = vrot.slane %v1496, 7
        %v1499 = vrot.slane %v1498, 2
        %1500 = vrot.lane.b32.xlu0 %v1499, 64
        %v1501 = vpop.permute.xlu0 %1500
        %v1502 = vrot.slane %v1501, 2
        %v1503 = vsel %vm661, %v1501, %v1502
        %v1505 = vadd.f32 %v1494, %v1503
        %s1506 = sld [smem:[#allocation7 + $0x28]]
        %s1507 = sld [smem:[#allocation7 + $0x59]]
        %v1508 = vstv %s1506
        %v1509 = vmul.f32 %v1508, %v569
        %1511 = vrot.lane.b32.xlu0 %v1509, 48
        %v1512 = vpop.permute.xlu0 %1511
        %v1513 = vrot.slane %v1512, 2
        %v1514 = vsel %vm684, %v1512, %v1513
        %v1516 = vadd.f32 %v1505, %v1514
        %v1517 = vstv %s1507
        %v1518 = vmul.f32 %v1517, %v569
        %v1520 = vrot.slane %v1518, 7
        %v1521 = vrot.slane %v1520, 2
        %1522 = vrot.lane.b32.xlu0 %v1521, 48
        %v1523 = vpop.permute.xlu0 %1522
        %v1524 = vrot.slane %v1523, 2
        %v1525 = vsel %vm684, %v1523, %v1524
        %v1527 = vadd.f32 %v1516, %v1525
        %s1528 = sld [smem:[#allocation7 + $0x2f]]
        %s1529 = sld [smem:[#allocation7 + $0x60]]
        %v1530 = vstv %s1528
        %v1531 = vmul.f32 %v1530, %v569
        %1533 = vrot.lane.b32.xlu0 %v1531, 32
        %v1534 = vpop.permute.xlu0 %1533
        %v1535 = vrot.slane %v1534, 2
        %v1536 = vsel %vm301, %v1534, %v1535
        %v1538 = vadd.f32 %v1527, %v1536
        %v1539 = vstv %s1529
        %v1540 = vmul.f32 %v1539, %v569
        %v1542 = vrot.slane %v1540, 7
        %v1543 = vrot.slane %v1542, 2
        %1544 = vrot.lane.b32.xlu0 %v1543, 32
        %v1545 = vpop.permute.xlu0 %1544
        %v1546 = vrot.slane %v1545, 2
        %v1547 = vsel %vm301, %v1545, %v1546
        %v1549 = vadd.f32 %v1538, %v1547
        %v1551 = vperm.slane %v1549, 0
        %v1552 = vperm.slane %v1549, 2
        %v1553 = vperm.slane %v1549, 4
        %1554 = vrot.lane.b32.xlu0 %v1551, 123
        %v1555 = vpop.permute.xlu0 %1554
        %1556 = vrot.lane.b32.xlu0 %v1552, 123
        %v1557 = vpop.permute.xlu0 %1556
        %1558 = vrot.lane.b32.xlu0 %v1553, 123
        %v1559 = vpop.permute.xlu0 %1558
        %vm1560 = vcmask 1006592
        %v1561 = vsel %vm1560, %v1555, %v1557
        %v1562 = vsel %vm1560, %v1557, %v1559
        %v1565 = vmul.f32 %v570, %v1561
        %v1566 = vmul.f32 %v571, %v1562
        %v1569 = vrot.slane %v1565, 5
        %v1570 = vrot.slane %v1566, 5
        %v1573 = vadd.f32 %v1404, %v1569
        %v1574 = vadd.f32 %v1405, %v1570
        %s1575 = sld [smem:[#allocation7 + $0x6]]
        %s1576 = sld [smem:[#allocation7 + $0x37]]
        %v1577 = vstv %s1575
        %v1578 = vmul.f32 %v1577, %v569
        %v1579 = vadd.f32 %v1578, 0.0
        %v1580 = vstv %s1576
        %v1581 = vmul.f32 %v1580, %v569
        %v1583 = vrot.slane %v1581, 7
        %v1584 = vrot.slane %v1583, 2
        %v1586 = vadd.f32 %v1579, %v1584
        %s1587 = sld [smem:[#allocation7 + $0xd]]
        %s1588 = sld [smem:[#allocation7 + $0x3e]]
        %v1589 = vstv %s1587
        %v1590 = vmul.f32 %v1589, %v569
        %1592 = vrot.lane.b32.xlu0 %v1590, 112
        %v1593 = vpop.permute.xlu0 %1592
        %v1594 = vrot.slane %v1593, 2
        %v1595 = vsel %vm592, %v1593, %v1594
        %v1597 = vadd.f32 %v1586, %v1595
        %v1598 = vstv %s1588
        %v1599 = vmul.f32 %v1598, %v569
        %v1601 = vrot.slane %v1599, 7
        %v1602 = vrot.slane %v1601, 2
        %1603 = vrot.lane.b32.xlu0 %v1602, 112
        %v1604 = vpop.permute.xlu0 %1603
        %v1605 = vrot.slane %v1604, 2
        %v1606 = vsel %vm592, %v1604, %v1605
        %v1608 = vadd.f32 %v1597, %v1606
        %s1609 = sld [smem:[#allocation7 + $0x14]]
        %s1610 = sld [smem:[#allocation7 + $0x45]]
        %v1611 = vstv %s1609
        %v1612 = vmul.f32 %v1611, %v569
        %1614 = vrot.lane.b32.xlu0 %v1612, 96
        %v1615 = vpop.permute.xlu0 %1614
        %v1616 = vrot.slane %v1615, 2
        %v1617 = vsel %vm615, %v1615, %v1616
        %v1619 = vadd.f32 %v1608, %v1617
        %v1620 = vstv %s1610
        %v1621 = vmul.f32 %v1620, %v569
        %v1623 = vrot.slane %v1621, 7
        %v1624 = vrot.slane %v1623, 2
        %1625 = vrot.lane.b32.xlu0 %v1624, 96
        %v1626 = vpop.permute.xlu0 %1625
        %v1627 = vrot.slane %v1626, 2
        %v1628 = vsel %vm615, %v1626, %v1627
        %v1630 = vadd.f32 %v1619, %v1628
        %s1631 = sld [smem:[#allocation7 + $0x1b]]
        %s1632 = sld [smem:[#allocation7 + $0x4c]]
        %v1633 = vstv %s1631
        %v1634 = vmul.f32 %v1633, %v569
        %1636 = vrot.lane.b32.xlu0 %v1634, 80
        %v1637 = vpop.permute.xlu0 %1636
        %v1638 = vrot.slane %v1637, 2
        %v1639 = vsel %vm638, %v1637, %v1638
        %v1641 = vadd.f32 %v1630, %v1639
        %v1642 = vstv %s1632
        %v1643 = vmul.f32 %v1642, %v569
        %v1645 = vrot.slane %v1643, 7
        %v1646 = vrot.slane %v1645, 2
        %1647 = vrot.lane.b32.xlu0 %v1646, 80
        %v1648 = vpop.permute.xlu0 %1647
        %v1649 = vrot.slane %v1648, 2
        %v1650 = vsel %vm638, %v1648, %v1649
        %v1652 = vadd.f32 %v1641, %v1650
        %s1653 = sld [smem:[#allocation7 + $0x22]]
        %s1654 = sld [smem:[#allocation7 + $0x53]]
        %v1655 = vstv %s1653
        %v1656 = vmul.f32 %v1655, %v569
        %1658 = vrot.lane.b32.xlu0 %v1656, 64
        %v1659 = vpop.permute.xlu0 %1658
        %v1660 = vrot.slane %v1659, 2
        %v1661 = vsel %vm661, %v1659, %v1660
        %v1663 = vadd.f32 %v1652, %v1661
        %v1664 = vstv %s1654
        %v1665 = vmul.f32 %v1664, %v569
        %v1667 = vrot.slane %v1665, 7
        %v1668 = vrot.slane %v1667, 2
        %1669 = vrot.lane.b32.xlu0 %v1668, 64
        %v1670 = vpop.permute.xlu0 %1669
        %v1671 = vrot.slane %v1670, 2
        %v1672 = vsel %vm661, %v1670, %v1671
        %v1674 = vadd.f32 %v1663, %v1672
        %s1675 = sld [smem:[#allocation7 + $0x29]]
        %s1676 = sld [smem:[#allocation7 + $0x5a]]
        %v1677 = vstv %s1675
        %v1678 = vmul.f32 %v1677, %v569
        %1680 = vrot.lane.b32.xlu0 %v1678, 48
        %v1681 = vpop.permute.xlu0 %1680
        %v1682 = vrot.slane %v1681, 2
        %v1683 = vsel %vm684, %v1681, %v1682
        %v1685 = vadd.f32 %v1674, %v1683
        %v1686 = vstv %s1676
        %v1687 = vmul.f32 %v1686, %v569
        %v1689 = vrot.slane %v1687, 7
        %v1690 = vrot.slane %v1689, 2
        %1691 = vrot.lane.b32.xlu0 %v1690, 48
        %v1692 = vpop.permute.xlu0 %1691
        %v1693 = vrot.slane %v1692, 2
        %v1694 = vsel %vm684, %v1692, %v1693
        %v1696 = vadd.f32 %v1685, %v1694
        %s1697 = sld [smem:[#allocation7 + $0x30]]
        %s1698 = sld [smem:[#allocation7 + $0x61]]
        %v1699 = vstv %s1697
        %v1700 = vmul.f32 %v1699, %v569
        %1702 = vrot.lane.b32.xlu0 %v1700, 32
        %v1703 = vpop.permute.xlu0 %1702
        %v1704 = vrot.slane %v1703, 2
        %v1705 = vsel %vm301, %v1703, %v1704
        %v1707 = vadd.f32 %v1696, %v1705
        %v1708 = vstv %s1698
        %v1709 = vmul.f32 %v1708, %v569
        %v1711 = vrot.slane %v1709, 7
        %v1712 = vrot.slane %v1711, 2
        %1713 = vrot.lane.b32.xlu0 %v1712, 32
        %v1714 = vpop.permute.xlu0 %1713
        %v1715 = vrot.slane %v1714, 2
        %v1716 = vsel %vm301, %v1714, %v1715
        %v1718 = vadd.f32 %v1707, %v1716
        %v1720 = vperm.slane %v1718, 0
        %v1721 = vperm.slane %v1718, 2
        %v1722 = vperm.slane %v1718, 4
        %1723 = vrot.lane.b32.xlu0 %v1720, 122
        %v1724 = vpop.permute.xlu0 %1723
        %1725 = vrot.lane.b32.xlu0 %v1721, 122
        %v1726 = vpop.permute.xlu0 %1725
        %1727 = vrot.lane.b32.xlu0 %v1722, 122
        %v1728 = vpop.permute.xlu0 %1727
        %vm1729 = vcmask 998400
        %v1730 = vsel %vm1729, %v1724, %v1726
        %v1731 = vsel %vm1729, %v1726, %v1728
        %v1734 = vmul.f32 %v570, %v1730
        %v1735 = vmul.f32 %v571, %v1731
        %v1738 = vrot.slane %v1734, 6
        %v1739 = vrot.slane %v1735, 6
        %v1742 = vadd.f32 %v1573, %v1738
        %v1743 = vadd.f32 %v1574, %v1739
        %v1744 = vxor.u32 %v1742, 2147483648
        %v1745 = vxor.u32 %v1743, 2147483648
        %v1746 = vmul.f32 %v1744, 1.442695
        %v1747 = vpow.pop %v1746
        %v1748 = vmul.f32 %v1745, 1.442695
        %v1749 = vpow.pop %v1748
        %v1750 = vadd.f32 %v1747, 1.0
        %v1751 = vadd.f32 %v1749, 1.0
        %v1752 = vrcp.pop %v1750
        %v1753 = vmul.f32 %v1750, %v1752
        %v1754 = vsub.f32 1.0, %v1753
        %v1755 = vmul.f32 %v1752, %v1754
        %v1756 = vadd.f32 %v1752, %v1755
        %vm1757 = vweird.f32 %v1750
        %vm1758 = vweird.f32 %v1752
        %vm1759 = vmor %vm1757, %vm1758
        %v1760 = vsel %vm1759, %v1752, %v1756
        %v1761 = vand.u32 2147483647, %v1750
        %vm1762 = vcmp.eq.f32.partialorder %v1761, 8.507059e+37
        %v1763 = vand.u32 %v1750, 2147483648
        %v1764 = vor.u32 1.1754944e-38, %v1763
        %v1765 = vsel %vm1762, %v1764, %v1760
        %v1766 = vmul.f32 1.0, %v1765
        %v1767 = vrcp.pop %v1751
        %v1768 = vmul.f32 %v1751, %v1767
        %v1769 = vsub.f32 1.0, %v1768
        %v1770 = vmul.f32 %v1767, %v1769
        %v1771 = vadd.f32 %v1767, %v1770
        %vm1772 = vweird.f32 %v1751
        %vm1773 = vweird.f32 %v1767
        %vm1774 = vmor %vm1772, %vm1773
        %v1775 = vsel %vm1774, %v1767, %v1771
        %v1776 = vand.u32 2147483647, %v1751
        %vm1777 = vcmp.eq.f32.partialorder %v1776, 8.507059e+37
        %v1778 = vand.u32 %v1751, 2147483648
        %v1779 = vor.u32 1.1754944e-38, %v1778
        %v1780 = vsel %vm1777, %v1779, %v1775
        %v1781 = vmul.f32 1.0, %v1780
        %v1782 = vperm.slane %v1766, 0
        %v1783 = vperm.slane %v1781, 0
        %v1784 = vmul.f32 %v492, %v1782
        %v1785 = vmul.f32 %v493, %v1783
        %v1786 = vmul.f32 %v494, %v1782
        %v1787 = vmul.f32 %v495, %v1783
        %v1788 = vmul.f32 %v496, %v1782
        %v1789 = vmul.f32 %v497, %v1783
        %v1790 = vmul.f32 %v498, %v1782
        %v1791 = vmul.f32 %v499, %v1783
        %1792 = vst [vmem:[%s258] sm:$0xff] %v1784
        %1793 = vst [vmem:[%s258 + $0x8] sm:$0xff] %v1785
        %1794 = vst [vmem:[%s258 + $0x10] sm:$0xff] %v1786
        %1795 = vst [vmem:[%s258 + $0x18] sm:$0xff] %v1787
        %1796 = vst [vmem:[%s258 + $0x20] sm:$0xff] %v1788
        %1797 = vst [vmem:[%s258 + $0x28] sm:$0xff] %v1789
        %1798 = vst [vmem:[%s258 + $0x30] sm:$0xff] %v1790
        %1799 = vst [vmem:[%s258 + $0x38] sm:$0xff] %v1791
        %s1800 = sand.u32 %s141, 1
        %s1801 = scalar_lea.sflag [#allocation5], %s1800
        %s1802 = sand.u32 %s141, 1
        %s1803 = smul.addr %s1802, 64
        %s1804 = scalar_lea.vmem [#allocation8], %s1803
        // Predicated region
        $region49: #{tpu_custom_call.1} parent=39 // pred_check
          %p1805 = pneg %p151
        $region50: #{tpu_custom_call.1} parent=39 // pred_check_branch
          %1807 = sbr.rel (%p1805) target = $region52
        $region51: #{tpu_custom_call.1} parent=39 // pred_region
          %1809 = vsyncadd %s1801, 0
          %s1810 = smul.addr %s23, 8
          %s1811 = smul.addr %s1810, 8
          %s1812 = scalar_lea.hbm %s5, %s1811
          %s1813 = sshll.u32 %s1804, 4
          %s1814 = int_to_ptr.vmem [resolvable:$true] %s1813
          %s1815 = sshll.u32 %s1812, 4
          %s1816 = int_to_ptr.hbm [resolvable:$true] %s1815
          %1821 = dma.vmem_to_hbm [thread:$0]  %s1814, 1024, %s1816, %s1801, 256, 256, 16
        $region52: #{tpu_custom_call.1} parent=39 // pred_fallthru
          _
      $region40: #{tpu_custom_call.1} parent=5 // pred_fallthru
        _
      %p1822 = scmp.le.s32.totalorder 2, %s18
      // Predicated region
      $region53: #{tpu_custom_call.1} parent=5 // pred_check
        %p1823 = pneg %p1822
      $region54: #{tpu_custom_call.1} parent=5 // pred_check_branch
        %1825 = sbr.rel (%p1823) target = $region56
      $region55: #{tpu_custom_call.1} parent=5 // pred_region
        %s1826 = ssub.s32 %s18, 2
        // Predicated region
        $region57: #{tpu_custom_call.1} parent=55 // pred_check
          %p1827 = pneg %p157
        $region58: #{tpu_custom_call.1} parent=55 // pred_check_branch
          %1829 = sbr.rel (%p1827) target = $region60
        $region59: #{tpu_custom_call.1} parent=55 // pred_region
          %s1830 = sand.u32 %s142, 1
          %s1831 = scalar_lea.sflag [#allocation5], %s1830
          %s1832 = sand.u32 %s142, 1
          %s1833 = smul.addr %s1832, 64
          %s1834 = scalar_lea.vmem [#allocation8], %s1833
          %1836 = dma.done %s1831, 1024
        $region60: #{tpu_custom_call.1} parent=55 // pred_fallthru
          _
      $region56: #{tpu_custom_call.1} parent=5 // pred_fallthru
        _
    $region6: #{tpu_custom_call.1} parent=1 // loop_footer
      %s22 = sadd.s32 1, %s18
    $region7: #{tpu_custom_call.1} parent=1 // loop_footer_branch
      %17 = sbr.rel target = $region3
    $region8: #{tpu_custom_call.1} parent=1 // loop_exit
      _
    %1837 = vsyncpa [#allocation4], 1
    %s1838 = scalar_lea.sflag [#allocation4], 1
    %1839 = vsyncpa %s1838, 1
    %1840 = vsyncpa [#allocation5], 1
    %s1841 = scalar_lea.sflag [#allocation5], 1
    %1842 = vsyncpa %s1841, 1
    %1843 = vsyncpa [#allocation6], 1
    %s1844 = scalar_lea.sflag [#allocation6], 1
    %1845 = vsyncpa %s1844, 1

</llo_original>
